<compile_context>
chip_gen: v7x
topology: tpu7x:2x2x1
jax: 0.10.0
libtpu: 0.0.40
codegen_flags: <defaults>
</compile_context>

<pallas_src>
import numpy as np
import jax
import jax.numpy as jnp
from jax.experimental import pallas as pl
from jax.experimental.pallas import tpu as pltpu

IN_SIZE = 4
OUT_SIZE = 32


def _round_up(a, m):
    return -(-a // m) * m


def nan_embed_kernel(x_ref, ea_ref, eb_ref, wout_ref, bout_ref, o_ref):
    x = x_ref[...]                                    # (TG, R*I) f32, may contain NaN / +-inf
    nanm = jnp.isnan(x)
    keep = jnp.logical_not(nanm).astype(jnp.float32)  # 1 where valid, 0 where NaN
    xc = jnp.where(nanm, jnp.float32(0), x)           # NaN -> 0
    # torch.nan_to_num also clamps +/-inf to the largest finite f32; without this an inf feature
    # would hit inf*0 = NaN inside z = a*k for masked positions and NaN the whole row.
    fmax = jnp.float32(np.finfo(np.float32).max)
    xc = jnp.clip(xc, -fmax, fmax)

    # Lane expansion via 0/1 matmuls on the MXU -> no cross-lane VPU/XLU work per step.
    a = jnp.dot(xc, ea_ref[...], preferred_element_type=jnp.float32)    # (TG, R*I*I)
    k = jnp.dot(keep, eb_ref[...], preferred_element_type=jnp.float32)  # (TG, R*I*I)
    z = a * k   # z[g, r*I*I + j*I + i] = xc[b, j] * keep[b, i]   with b = g*R + r

    # Masked mean + bias, both folded into pre-scaled weights (includes the 1/I factor).
    acc = (jnp.dot(z, wout_ref[...], preferred_element_type=jnp.float32)
           + jnp.dot(keep, bout_ref[...], preferred_element_type=jnp.float32))
    o_ref[...] = acc.astype(o_ref.dtype)


def make_nan_embed(weights, mask, bias, *, block_rows=2048, out_dtype=jnp.float32):
    """Fold all input-invariant parameters ONCE and return a jitted fn(x:(B,I)) -> (B,O)."""
    w = np.asarray(weights, np.float32)               # (I, I*O)
    m = np.asarray(mask)                              # (I, I*O) bool
    b = np.asarray(bias, np.float32)                  # (I*O,)
    I, IO = w.shape
    O = IO // I
    wm = w * m                                        # masked weights; no mask stream in-kernel

    R = 128 // O if (O <= 128 and 128 % O == 0) else 1   # batch rows packed per kernel row
    K2 = I * I
    OUT_W = _round_up(R * O, 128)                     # lane-dense output block for any O
    block_rows = max(8, _round_up(block_rows, 8))

    # Wout[r*K2 + j*I + i, r*O + o] = Wm[j, i*O+o] / I   (block diagonal over r, zero-padded cols)
    # Bout[r*I + i,        r*O + o] = bias[i*O+o]  / I
    w3 = wm.reshape(I * I, O) / I
    b2 = b.reshape(I, O) / I
    wout = np.zeros((R * K2, OUT_W), np.float32)
    bout = np.zeros((R * I, OUT_W), np.float32)
    for r in range(R):
        wout[r * K2:(r + 1) * K2, r * O:(r + 1) * O] = w3
        bout[r * I:(r + 1) * I, r * O:(r + 1) * O] = b2

    # Static 0/1 lane-expansion matrices (EA copies xc[j] to (j,i), EB copies keep[i] to (j,i)).
    ea = np.zeros((R * I, R * K2), np.float32)
    eb = np.zeros((R * I, R * K2), np.float32)
    for r in range(R):
        for j in range(I):
            for i in range(I):
                ea[r * I + j, r * K2 + j * I + i] = 1.0
                eb[r * I + i, r * K2 + j * I + i] = 1.0

    # Device-resident constants, uploaded once and captured by the jitted closure below.
    ea_d, eb_d = jnp.asarray(ea), jnp.asarray(eb)
    wout_d, bout_d = jnp.asarray(wout), jnp.asarray(bout)

    @jax.jit
    def nan_embed(x):
        B = x.shape[0]
        G = -(-B // R)                                # packed rows needed

        # Choose tiling: large blocks (amortize ~0.35us/step), but >=2 (even) steps whenever the
        # batch allows so both v7x TensorCores get work; v5e/v6e just see 2-4 big steps.
        steps = max(1, -(-G // block_rows))
        if steps == 1 and G > 8:
            steps = 2
        if steps > 1 and steps % 2:
            steps += 1
        TG = min(block_rows, _round_up(max(-(-G // steps), 1), 8))   # multiple of 8
        G_pad = _round_up(G, TG)
        B_pad = G_pad * R

        x_p = x.astype(jnp.float32)
        if B_pad != B:
            # TODO(synk): ragged batches pay one fused pad copy here (and a tail slice below);
            # a masked edge block inside the kernel would avoid it. Exact-multiple batches
            # (the common case) skip both entirely under jit.
            x_p = jnp.pad(x_p, ((0, B_pad - B), (0, 0)))
        x_p = x_p.reshape(G_pad, R * I)               # row-major repack: free reshape

        out_p = pl.pallas_call(
            nan_embed_kernel,
            out_shape=jax.ShapeDtypeStruct((G_pad, OUT_W), out_dtype),
            grid=(G_pad // TG,),
            in_specs=[
                pl.BlockSpec((TG, R * I), lambda g: (g, 0)),        # streamed batch tile
                # Constant-index_map params: fetched once, stay VMEM-resident across the grid.
                pl.BlockSpec((R * I, R * K2), lambda g: (0, 0)),    # EA
                pl.BlockSpec((R * I, R * K2), lambda g: (0, 0)),    # EB
                pl.BlockSpec((R * K2, OUT_W), lambda g: (0, 0)),    # Wout (mask+mean folded)
                pl.BlockSpec((R * I, OUT_W), lambda g: (0, 0)),     # Bout (bias+mean folded)
            ],
            out_specs=pl.BlockSpec((TG, OUT_W), lambda g: (g, 0)),  # lane-dense output slab
            compiler_params=pltpu.CompilerParams(
                dimension_semantics=("parallel",)),                 # shards across v7x TCs
        )(x_p, ea_d, eb_d, wout_d, bout_d)

        if OUT_W != R * O:                            # only when O does not divide 128
            out_p = out_p[:, :R * O]
        out = out_p.reshape(B_pad, O)
        if B_pad != B:
            out = out[:B]
        return out

    return nan_embed


def reference(x, weights, mask, bias):
    """Pure-JAX reference matching the torch module (incl. torch.nan_to_num inf clamping)."""
    I = weights.shape[0]
    O = weights.shape[1] // I
    nan_mask = jnp.isnan(x)
    xc = jnp.nan_to_num(x)                            # NaN->0, +/-inf -> finite max/min
    out = xc @ (weights * mask) + bias
    out = out.reshape(-1, I, O)
    out = jnp.where(nan_mask[:, :, None], 0.0, out)
    return out.mean(axis=1)


if __name__ == "__main__":
    key = jax.random.PRNGKey(0)
    k_x, k_w, k_b, k_nan = jax.random.split(key, 4)

    I, O = IN_SIZE, OUT_SIZE

    # ContinuousEmbedding parameters (deterministic in-script init).
    rows = jnp.arange(I)[:, None]
    cols = jnp.arange(I * O)[None, :]
    mask = ~((cols >= rows * O) & (cols < (rows + 1) * O))   # torch 'mask' buffer (True = keep)
    weights = 0.1 * jax.random.normal(k_w, (I, I * O), jnp.float32)
    bias = jax.random.uniform(k_b, (I * O,), jnp.float32)

    # Parameter folding + H2D upload happens ONCE here, not per call.
    nan_embed = make_nan_embed(weights, mask, bias)

    # Main case: exact tile multiple -> pad/slice elided, 2 'parallel' grid steps of 512 packed rows.
    B = 4096
    x = jax.random.normal(k_x, (B, I), jnp.float32)
    x = jnp.where(jax.random.bernoulli(k_nan, 0.3, (B, I)), jnp.nan, x)

    out = jax.block_until_ready(nan_embed(x))
    ref = reference(x, weights, mask, bias)
    assert out.shape == (B, O)
    assert bool(jnp.all(jnp.isfinite(out)))
    assert jnp.allclose(out, ref, atol=1e-4, rtol=1e-4), "mismatch vs reference (large batch)"

    # Small / odd batch exercises the packing + ragged padding path.
    B2 = 10
    out2 = jax.block_until_ready(nan_embed(x[:B2]))
    assert out2.shape == (B2, O)
    assert jnp.allclose(out2, reference(x[:B2], weights, mask, bias), atol=1e-4, rtol=1e-4), \
        "mismatch vs reference (small batch)"

    # +/-inf handling matches torch.nan_to_num (clamped; no NaN leak through inf*0).
    x3 = x[:16].at[0, 1].set(jnp.inf).at[3, 2].set(-jnp.inf)
    out3 = jax.block_until_ready(nan_embed(x3))
    ref3 = reference(x3, weights, mask, bias)
    assert not bool(jnp.any(jnp.isnan(out3)))
    assert jnp.allclose(out3, ref3, atol=1e-3, rtol=1e-3), "mismatch vs reference (inf inputs)"

    # Optional bf16 output store (halves the dominant HBM writeback stream).
    nan_embed_bf16 = make_nan_embed(weights, mask, bias, out_dtype=jnp.bfloat16)
    out_bf = jax.block_until_ready(nan_embed_bf16(x[:256]))
    assert out_bf.dtype == jnp.bfloat16
    assert jnp.allclose(out_bf.astype(jnp.float32), reference(x[:256], weights, mask, bias),
                        atol=3e-2, rtol=3e-2), "mismatch vs reference (bf16 output)"

    print("KERNEL_OK")
</pallas_src>

<mosaic_0001>
module attributes {stable_mosaic.version = 11 : i64} {
  func.func @nan_embed_kernel(%arg0: i32, %arg1: memref<512x16xf32, #tpu.memory_space<vmem>>, %arg2: memref<16x64xf32, #tpu.memory_space<vmem>>, %arg3: memref<16x64xf32, #tpu.memory_space<vmem>>, %arg4: memref<64x128xf32, #tpu.memory_space<vmem>>, %arg5: memref<16x128xf32, #tpu.memory_space<vmem>>, %arg6: memref<512x128xf32, #tpu.memory_space<vmem>>) attributes {dimension_semantics = [#tpu.dimension_semantics<parallel>], iteration_bounds = array<i64: 2>, scalar_prefetch = 0 : i64, scratch_operands = 0 : i64, tpu.core_type = #tpu.core_type<tc>, window_params = [{transform_indices = @transform_0, window_bounds = array<i64: 512, 16>}, {pipeline_mode = #tpu.pipeline_mode<synchronous>, transform_indices = @transform_1, window_bounds = array<i64: 16, 64>}, {pipeline_mode = #tpu.pipeline_mode<synchronous>, transform_indices = @transform_2, window_bounds = array<i64: 16, 64>}, {pipeline_mode = #tpu.pipeline_mode<synchronous>, transform_indices = @transform_3, window_bounds = array<i64: 64, 128>}, {pipeline_mode = #tpu.pipeline_mode<synchronous>, transform_indices = @transform_4, window_bounds = array<i64: 16, 128>}, {transform_indices = @transform_5, window_bounds = array<i64: 512, 128>}]} {
    %c0 = arith.constant 0 : index
    %c0_0 = arith.constant 0 : index
    %0 = vector.load %arg1[%c0, %c0_0] : memref<512x16xf32, #tpu.memory_space<vmem>>, vector<512x16xf32>
    %1 = arith.cmpf one, %0, %0 : vector<512x16xf32>
    %cst = arith.constant dense<true> : vector<512x16xi1>
    %2 = arith.xori %1, %cst : vector<512x16xi1>
    %3 = arith.extui %2 : vector<512x16xi1> to vector<512x16xi32>
    %4 = arith.sitofp %3 : vector<512x16xi32> to vector<512x16xf32>
    %cst_1 = arith.constant 0.000000e+00 : f32
    %5 = vector.broadcast %cst_1 : f32 to vector<512x16xf32>
    %6 = arith.select %1, %5, %0 : vector<512x16xi1>, vector<512x16xf32>
    %cst_2 = arith.constant 0.000000e+00 : f32
    %cst_3 = arith.constant 3.40282347E+38 : f32
    %7 = arith.subf %cst_2, %cst_3 : f32
    %cst_4 = arith.constant 3.40282347E+38 : f32
    %8 = vector.broadcast %7 : f32 to vector<512x16xf32>
    %9 = arith.maximumf %8, %6 : vector<512x16xf32>
    %10 = vector.broadcast %cst_4 : f32 to vector<512x16xf32>
    %11 = arith.minimumf %10, %9 : vector<512x16xf32>
    %c0_5 = arith.constant 0 : index
    %c0_6 = arith.constant 0 : index
    %12 = vector.load %arg2[%c0_5, %c0_6] : memref<16x64xf32, #tpu.memory_space<vmem>>, vector<16x64xf32>
    %cst_7 = arith.constant dense<0.000000e+00> : vector<512x64xf32>
    %13 = tpu.matmul %11, %12, %cst_7 {dimension_numbers = #tpu.dot_dimension_numbers<[1], [0], [0], [1], [0, 0, 1, 1], [], []>} : vector<512x16xf32>, vector<16x64xf32>, vector<512x64xf32> -> vector<512x64xf32>
    %c0_8 = arith.constant 0 : index
    %c0_9 = arith.constant 0 : index
    %14 = vector.load %arg3[%c0_8, %c0_9] : memref<16x64xf32, #tpu.memory_space<vmem>>, vector<16x64xf32>
    %cst_10 = arith.constant dense<0.000000e+00> : vector<512x64xf32>
    %15 = tpu.matmul %4, %14, %cst_10 {dimension_numbers = #tpu.dot_dimension_numbers<[1], [0], [0], [1], [0, 0, 1, 1], [], []>} : vector<512x16xf32>, vector<16x64xf32>, vector<512x64xf32> -> vector<512x64xf32>
    %16 = arith.mulf %13, %15 : vector<512x64xf32>
    %c0_11 = arith.constant 0 : index
    %c0_12 = arith.constant 0 : index
    %17 = vector.load %arg4[%c0_11, %c0_12] : memref<64x128xf32, #tpu.memory_space<vmem>>, vector<64x128xf32>
    %cst_13 = arith.constant dense<0.000000e+00> : vector<512x128xf32>
    %18 = tpu.matmul %16, %17, %cst_13 {dimension_numbers = #tpu.dot_dimension_numbers<[1], [0], [0], [1], [0, 0, 1, 1], [], []>} : vector<512x64xf32>, vector<64x128xf32>, vector<512x128xf32> -> vector<512x128xf32>
    %c0_14 = arith.constant 0 : index
    %c0_15 = arith.constant 0 : index
    %19 = vector.load %arg5[%c0_14, %c0_15] : memref<16x128xf32, #tpu.memory_space<vmem>>, vector<16x128xf32>
    %cst_16 = arith.constant dense<0.000000e+00> : vector<512x128xf32>
    %20 = tpu.matmul %4, %19, %cst_16 {dimension_numbers = #tpu.dot_dimension_numbers<[1], [0], [0], [1], [0, 0, 1, 1], [], []>} : vector<512x16xf32>, vector<16x128xf32>, vector<512x128xf32> -> vector<512x128xf32>
    %21 = arith.addf %18, %20 : vector<512x128xf32>
    %c0_17 = arith.constant 0 : index
    %c0_18 = arith.constant 0 : index
    %22 = vector.load %arg6[%c0_17, %c0_18] : memref<512x128xf32, #tpu.memory_space<vmem>>, vector<512x128xf32>
    tpu.vector_store %arg6[%c0_17, %c0_18], %21 {strides = array<i32>} : memref<512x128xf32, #tpu.memory_space<vmem>>, vector<512x128xf32>,
    return
  }
  func.func @transform_0(%arg0: i32) -> (i32, i32) {
    %c0_i32 = arith.constant 0 : i32
    %c0_i32_0 = arith.constant 0 : i32
    return %arg0, %c0_i32 : i32, i32
  }
  func.func @transform_1(%arg0: i32) -> (i32, i32) {
    %c0_i32 = arith.constant 0 : i32
    %c0_i32_0 = arith.constant 0 : i32
    %c0_i32_1 = arith.constant 0 : i32
    return %c0_i32, %c0_i32_0 : i32, i32
  }
  func.func @transform_2(%arg0: i32) -> (i32, i32) {
    %c0_i32 = arith.constant 0 : i32
    %c0_i32_0 = arith.constant 0 : i32
    %c0_i32_1 = arith.constant 0 : i32
    return %c0_i32, %c0_i32_0 : i32, i32
  }
  func.func @transform_3(%arg0: i32) -> (i32, i32) {
    %c0_i32 = arith.constant 0 : i32
    %c0_i32_0 = arith.constant 0 : i32
    %c0_i32_1 = arith.constant 0 : i32
    return %c0_i32, %c0_i32_0 : i32, i32
  }
  func.func @transform_4(%arg0: i32) -> (i32, i32) {
    %c0_i32 = arith.constant 0 : i32
    %c0_i32_0 = arith.constant 0 : i32
    %c0_i32_1 = arith.constant 0 : i32
    return %c0_i32, %c0_i32_0 : i32, i32
  }
  func.func @transform_5(%arg0: i32) -> (i32, i32) {
    %c0_i32 = arith.constant 0 : i32
    %c0_i32_0 = arith.constant 0 : i32
    return %arg0, %c0_i32 : i32, i32
  }
}

</mosaic_0001>

<llo_original>
// kernel: nan_embed.1
$region0: #{nan_embed.1}
  #allocation0 [shape = 'u32[]', space=smem, size = 0x4, offset = 0x4, fixed_abs, tag = 'smem constant byte address 0x4 - core index']
  #allocation1 [shape = 'u32[144,128]{1,0:T(1,128)}', space=vmem, size = 0x12000, scoped, tag = 'internal scratch']
  %s0 = inlined_call_operand.vmem [shape: f32[1024,16], index: 0, kind: input, shape index: {}]
  %s1 = inlined_call_operand.vmem [shape: f32[16,64], index: 1, kind: input, shape index: {}]
  %s2 = inlined_call_operand.vmem [shape: f32[16,64], index: 2, kind: input, shape index: {}]
  %s3 = inlined_call_operand.vmem [shape: f32[64,128], index: 3, kind: input, shape index: {}]
  %s4 = inlined_call_operand.vmem [shape: f32[16,128], index: 4, kind: input, shape index: {}]
  %s5 = inlined_call_operand.vmem [shape: f32[1024,128], index: 5, kind: output, shape index: {}]
  %s6 = sld [smem:[#allocation0]]
  $region53: #{nan_embed.1} parent=0
    _
  %s8 = ssub.s32 1, %s6
  %s9 = scalar_select 0, %s8, %s6
  loop: start=0, step=1, limit=4
  $region2: #{nan_embed.1} parent=0 // loop_pre_header
    _
  $region3: #{nan_embed.1} parent=0 // loop_header
    %s11 = sphi 0, %s15
    %p12 = scmp.ge.s32.totalorder %s11, 4
    %s21 = sphi 0, %s23
    %s24 = sphi 0, %s21
    %s25 = sphi 0, %s24
    %s41 = sphi 0, %s25
    %s45 = sphi 0, %s45
    %s47 = sphi 0, %s45
    %s48 = sphi 0, %s47
    %s62 = sphi 0, %s48
    %s66 = sphi 0, %s66
    %s68 = sphi 0, %s66
    %s69 = sphi 0, %s68
    %s83 = sphi 0, %s69
    %s87 = sphi 0, %s87
    %s89 = sphi 0, %s87
    %s90 = sphi 0, %s89
    %s104 = sphi 0, %s90
    %s108 = sphi 0, %s108
    %s110 = sphi 0, %s108
    %s111 = sphi 0, %s110
    %s125 = sphi 0, %s111
    %s131 = sphi 0, %s133
    %s134 = sphi 0, %s131
    %s135 = sphi 0, %s134
    %s151 = sphi 0, %s135
  $region4: #{nan_embed.1} parent=0 // loop_header_branch
    %14 = sbr.rel (%p12) target = $region8
  $region5: #{nan_embed.1} parent=0 // loop_body
    %s16 = ssub.s32 %s11, 1
    %s17 = ssub.s32 %s11, 2
    %s18 = sadd.s32 %s11, 1
    %s19 = ssub.s32 %s11, %s18
    %p20 = scmp.eq.s32.totalorder %s19, 0
    %s22 = sadd.s32 %s21, 1
    %s23 = scalar_select %p20, %s21, %s22
    %p26 = pneg %p20
    %p27 = scmp.eq.s32.totalorder %s11, 1
    %p28 = por %p26, %p27
    %p29 = scmp.ne.s32.totalorder %s21, %s24
    %p30 = scmp.eq.s32.totalorder %s11, 0
    %p31 = por %p29, %p30
    %p32 = scmp.ne.s32.totalorder %s21, %s24
    %p33 = scmp.eq.s32.totalorder %s16, 1
    %p34 = por %p32, %p33
    %p35 = scmp.ne.s32.totalorder %s24, %s25
    %p36 = scmp.eq.s32.totalorder %s16, 0
    %p37 = por %p35, %p36
    %p38 = scmp.ne.s32.totalorder %s24, %s25
    %p39 = scmp.eq.s32.totalorder %s17, 1
    %p40 = por %p38, %p39
    %p42 = scmp.ne.s32.totalorder %s25, %s41
    %p43 = scmp.eq.s32.totalorder %s17, 0
    %p44 = por %p42, %p43
    %s46 = sadd.s32 %s45, 1
    %p49 = scmp.eq.s32.totalorder %s11, 1
    %p50 = scmp.ne.s32.totalorder %s45, %s47
    %p51 = scmp.eq.s32.totalorder %s11, 0
    %p52 = por %p50, %p51
    %p53 = scmp.ne.s32.totalorder %s45, %s47
    %p54 = scmp.eq.s32.totalorder %s16, 1
    %p55 = por %p53, %p54
    %p56 = scmp.ne.s32.totalorder %s47, %s48
    %p57 = scmp.eq.s32.totalorder %s16, 0
    %p58 = por %p56, %p57
    %p59 = scmp.ne.s32.totalorder %s47, %s48
    %p60 = scmp.eq.s32.totalorder %s17, 1
    %p61 = por %p59, %p60
    %p63 = scmp.ne.s32.totalorder %s48, %s62
    %p64 = scmp.eq.s32.totalorder %s17, 0
    %p65 = por %p63, %p64
    %s67 = sadd.s32 %s66, 1
    %p70 = scmp.eq.s32.totalorder %s11, 1
    %p71 = scmp.ne.s32.totalorder %s66, %s68
    %p72 = scmp.eq.s32.totalorder %s11, 0
    %p73 = por %p71, %p72
    %p74 = scmp.ne.s32.totalorder %s66, %s68
    %p75 = scmp.eq.s32.totalorder %s16, 1
    %p76 = por %p74, %p75
    %p77 = scmp.ne.s32.totalorder %s68, %s69
    %p78 = scmp.eq.s32.totalorder %s16, 0
    %p79 = por %p77, %p78
    %p80 = scmp.ne.s32.totalorder %s68, %s69
    %p81 = scmp.eq.s32.totalorder %s17, 1
    %p82 = por %p80, %p81
    %p84 = scmp.ne.s32.totalorder %s69, %s83
    %p85 = scmp.eq.s32.totalorder %s17, 0
    %p86 = por %p84, %p85
    %s88 = sadd.s32 %s87, 1
    %p91 = scmp.eq.s32.totalorder %s11, 1
    %p92 = scmp.ne.s32.totalorder %s87, %s89
    %p93 = scmp.eq.s32.totalorder %s11, 0
    %p94 = por %p92, %p93
    %p95 = scmp.ne.s32.totalorder %s87, %s89
    %p96 = scmp.eq.s32.totalorder %s16, 1
    %p97 = por %p95, %p96
    %p98 = scmp.ne.s32.totalorder %s89, %s90
    %p99 = scmp.eq.s32.totalorder %s16, 0
    %p100 = por %p98, %p99
    %p101 = scmp.ne.s32.totalorder %s89, %s90
    %p102 = scmp.eq.s32.totalorder %s17, 1
    %p103 = por %p101, %p102
    %p105 = scmp.ne.s32.totalorder %s90, %s104
    %p106 = scmp.eq.s32.totalorder %s17, 0
    %p107 = por %p105, %p106
    %s109 = sadd.s32 %s108, 1
    %p112 = scmp.eq.s32.totalorder %s11, 1
    %p113 = scmp.ne.s32.totalorder %s108, %s110
    %p114 = scmp.eq.s32.totalorder %s11, 0
    %p115 = por %p113, %p114
    %p116 = scmp.ne.s32.totalorder %s108, %s110
    %p117 = scmp.eq.s32.totalorder %s16, 1
    %p118 = por %p116, %p117
    %p119 = scmp.ne.s32.totalorder %s110, %s111
    %p120 = scmp.eq.s32.totalorder %s16, 0
    %p121 = por %p119, %p120
    %p122 = scmp.ne.s32.totalorder %s110, %s111
    %p123 = scmp.eq.s32.totalorder %s17, 1
    %p124 = por %p122, %p123
    %p126 = scmp.ne.s32.totalorder %s111, %s125
    %p127 = scmp.eq.s32.totalorder %s17, 0
    %p128 = por %p126, %p127
    %s129 = ssub.s32 %s11, %s18
    %p130 = scmp.eq.s32.totalorder %s129, 0
    %s132 = sadd.s32 %s131, 1
    %s133 = scalar_select %p130, %s131, %s132
    %p136 = pneg %p130
    %p137 = scmp.eq.s32.totalorder %s11, 1
    %p138 = por %p136, %p137
    %p139 = scmp.ne.s32.totalorder %s131, %s134
    %p140 = scmp.eq.s32.totalorder %s11, 0
    %p141 = por %p139, %p140
    %p142 = scmp.ne.s32.totalorder %s131, %s134
    %p143 = scmp.eq.s32.totalorder %s16, 1
    %p144 = por %p142, %p143
    %p145 = scmp.ne.s32.totalorder %s134, %s135
    %p146 = scmp.eq.s32.totalorder %s16, 0
    %p147 = por %p145, %p146
    %p148 = scmp.ne.s32.totalorder %s134, %s135
    %p149 = scmp.eq.s32.totalorder %s17, 1
    %p150 = por %p148, %p149
    %p152 = scmp.ne.s32.totalorder %s135, %s151
    %p153 = scmp.eq.s32.totalorder %s17, 0
    %p154 = por %p152, %p153
    %p155 = scmp.le.s32.totalorder 1, %s11
    %p156 = scmp.lt.s32.totalorder %s11, 3
    %p157 = pnand %p155, %p156
    %p158 = pneg %p157
    // Predicated region
    $region9: #{nan_embed.1} parent=5 // pred_check
      _
    $region10: #{nan_embed.1} parent=5 // pred_check_branch
      %160 = sbr.rel (%p157) target = $region12
    $region11: #{nan_embed.1} parent=5 // pred_region
      %s161 = ssub.s32 %s11, 1
      // Predicated region
      $region13: #{nan_embed.1} parent=11 // pred_check
        %p162 = pneg %p58
      $region14: #{nan_embed.1} parent=11 // pred_check_branch
        %164 = sbr.rel (%p162) target = $region16
      $region15: #{nan_embed.1} parent=11 // pred_region
        _
      $region16: #{nan_embed.1} parent=11 // pred_fallthru
        _
      // Predicated region
      $region17: #{nan_embed.1} parent=11 // pred_check
        %p165 = pneg %p79
      $region18: #{nan_embed.1} parent=11 // pred_check_branch
        %167 = sbr.rel (%p165) target = $region20
      $region19: #{nan_embed.1} parent=11 // pred_region
        _
      $region20: #{nan_embed.1} parent=11 // pred_fallthru
        _
      // Predicated region
      $region21: #{nan_embed.1} parent=11 // pred_check
        %p168 = pneg %p100
      $region22: #{nan_embed.1} parent=11 // pred_check_branch
        %170 = sbr.rel (%p168) target = $region24
      $region23: #{nan_embed.1} parent=11 // pred_region
        _
      $region24: #{nan_embed.1} parent=11 // pred_fallthru
        _
      // Predicated region
      $region25: #{nan_embed.1} parent=11 // pred_check
        %p171 = pneg %p121
      $region26: #{nan_embed.1} parent=11 // pred_check_branch
        %173 = sbr.rel (%p171) target = $region28
      $region27: #{nan_embed.1} parent=11 // pred_region
        _
      $region28: #{nan_embed.1} parent=11 // pred_fallthru
        _
    $region12: #{nan_embed.1} parent=5 // pred_fallthru
      _
    %p174 = scmp.lt.s32.totalorder %s11, 2
    // Predicated region
    $region29: #{nan_embed.1} parent=5 // pred_check
      %p175 = pneg %p174
    $region30: #{nan_embed.1} parent=5 // pred_check_branch
      %177 = sbr.rel (%p175) target = $region32
    $region31: #{nan_embed.1} parent=5 // pred_region
      // Predicated region
      $region33: #{nan_embed.1} parent=31 // pred_check
        %p178 = pneg %p31
      $region34: #{nan_embed.1} parent=31 // pred_check_branch
        %180 = sbr.rel (%p178) target = $region36
      $region35: #{nan_embed.1} parent=31 // pred_region
        %s181 = smul.u32 64, %s11
        %p182 = scmp.lt.s32.totalorder %s181, 127
        %s183 = scalar_select %p182, %s181, 127
        %s184 = smul.addr %s183, 8
        %s185 = scalar_lea.vmem %s0, %s184
        %s186 = smul.u32 64, %s11
      $region36: #{nan_embed.1} parent=31 // pred_fallthru
        _
    $region32: #{nan_embed.1} parent=5 // pred_fallthru
      _
    %p187 = scmp.le.s32.totalorder 1, %s11
    %p188 = scmp.lt.s32.totalorder %s11, 3
    %p189 = pnand %p187, %p188
    %p190 = pneg %p189
    // Predicated region
    $region37: #{nan_embed.1} parent=5 // pred_check
      _
    $region38: #{nan_embed.1} parent=5 // pred_check_branch
      %192 = sbr.rel (%p189) target = $region40
    $region39: #{nan_embed.1} parent=5 // pred_region
      %s193 = ssub.s32 %s11, 1
      %s194 = smul.u32 64, %s16
      %p195 = scmp.lt.s32.totalorder %s194, 127
      %s196 = scalar_select %p195, %s194, 127
      %s197 = smul.addr %s196, 8
      %s198 = scalar_lea.vmem %s0, %s197
      %p199 = pneg %p37
      %p200 = pneg %p34
      %p201 = pneg %p58
      %p202 = pneg %p55
      %p203 = pneg %p79
      %p204 = pneg %p76
      %p205 = pneg %p100
      %p206 = pneg %p97
      %p207 = pneg %p121
      %p208 = pneg %p118
      %p209 = pneg %p147
      %p210 = pneg %p144
      %s211 = smul.u32 64, %s16
      %p212 = scmp.lt.s32.totalorder %s211, 127
      %s213 = scalar_select %p212, %s211, 127
      %s214 = smul.addr %s213, 8
      %s215 = scalar_lea.vmem %s5, %s214
      %s216 = smul.u32 64, %s16
      %p217 = scmp.lt.s32.totalorder %s216, 127
      %s218 = scalar_select %p217, %s216, 127
      %s219 = smul.addr %s218, 8
      %s220 = scalar_lea.vmem %s0, %s219
      %s221 = smul.u32 64, %s16
      %s222 = smul.u32 64, %s16
      %p223 = scmp.lt.s32.totalorder %s222, 127
      %s224 = scalar_select %p223, %s222, 127
      %s225 = smul.addr %s224, 8
      %s226 = scalar_lea.vmem %s5, %s225
      %s227 = smul.u32 64, %s16
      %v228 = vld [vmem:[%s220] sm:$0xff]
      %v229 = vld [vmem:[%s220 + $0x8] sm:$0xff]
      %v230 = vld [vmem:[%s220 + $0x10] sm:$0xff]
      %v231 = vld [vmem:[%s220 + $0x18] sm:$0xff]
      %v232 = vld [vmem:[%s220 + $0x20] sm:$0xff]
      %v233 = vld [vmem:[%s220 + $0x28] sm:$0xff]
      %v234 = vld [vmem:[%s220 + $0x30] sm:$0xff]
      %v235 = vld [vmem:[%s220 + $0x38] sm:$0xff]
      %v236 = vld [vmem:[%s220 + $0x40] sm:$0xff]
      %v237 = vld [vmem:[%s220 + $0x48] sm:$0xff]
      %v238 = vld [vmem:[%s220 + $0x50] sm:$0xff]
      %v239 = vld [vmem:[%s220 + $0x58] sm:$0xff]
      %v240 = vld [vmem:[%s220 + $0x60] sm:$0xff]
      %v241 = vld [vmem:[%s220 + $0x68] sm:$0xff]
      %v242 = vld [vmem:[%s220 + $0x70] sm:$0xff]
      %v243 = vld [vmem:[%s220 + $0x78] sm:$0xff]
      %v244 = vld [vmem:[%s220 + $0x80] sm:$0xff]
      %v245 = vld [vmem:[%s220 + $0x88] sm:$0xff]
      %v246 = vld [vmem:[%s220 + $0x90] sm:$0xff]
      %v247 = vld [vmem:[%s220 + $0x98] sm:$0xff]
      %v248 = vld [vmem:[%s220 + $0xa0] sm:$0xff]
      %v249 = vld [vmem:[%s220 + $0xa8] sm:$0xff]
      %v250 = vld [vmem:[%s220 + $0xb0] sm:$0xff]
      %v251 = vld [vmem:[%s220 + $0xb8] sm:$0xff]
      %v252 = vld [vmem:[%s220 + $0xc0] sm:$0xff]
      %v253 = vld [vmem:[%s220 + $0xc8] sm:$0xff]
      %v254 = vld [vmem:[%s220 + $0xd0] sm:$0xff]
      %v255 = vld [vmem:[%s220 + $0xd8] sm:$0xff]
      %v256 = vld [vmem:[%s220 + $0xe0] sm:$0xff]
      %v257 = vld [vmem:[%s220 + $0xe8] sm:$0xff]
      %v258 = vld [vmem:[%s220 + $0xf0] sm:$0xff]
      %v259 = vld [vmem:[%s220 + $0xf8] sm:$0xff]
      %v260 = vld [vmem:[%s220 + $0x100] sm:$0xff]
      %v261 = vld [vmem:[%s220 + $0x108] sm:$0xff]
      %v262 = vld [vmem:[%s220 + $0x110] sm:$0xff]
      %v263 = vld [vmem:[%s220 + $0x118] sm:$0xff]
      %v264 = vld [vmem:[%s220 + $0x120] sm:$0xff]
      %v265 = vld [vmem:[%s220 + $0x128] sm:$0xff]
      %v266 = vld [vmem:[%s220 + $0x130] sm:$0xff]
      %v267 = vld [vmem:[%s220 + $0x138] sm:$0xff]
      %v268 = vld [vmem:[%s220 + $0x140] sm:$0xff]
      %v269 = vld [vmem:[%s220 + $0x148] sm:$0xff]
      %v270 = vld [vmem:[%s220 + $0x150] sm:$0xff]
      %v271 = vld [vmem:[%s220 + $0x158] sm:$0xff]
      %v272 = vld [vmem:[%s220 + $0x160] sm:$0xff]
      %v273 = vld [vmem:[%s220 + $0x168] sm:$0xff]
      %v274 = vld [vmem:[%s220 + $0x170] sm:$0xff]
      %v275 = vld [vmem:[%s220 + $0x178] sm:$0xff]
      %v276 = vld [vmem:[%s220 + $0x180] sm:$0xff]
      %v277 = vld [vmem:[%s220 + $0x188] sm:$0xff]
      %v278 = vld [vmem:[%s220 + $0x190] sm:$0xff]
      %v279 = vld [vmem:[%s220 + $0x198] sm:$0xff]
      %v280 = vld [vmem:[%s220 + $0x1a0] sm:$0xff]
      %v281 = vld [vmem:[%s220 + $0x1a8] sm:$0xff]
      %v282 = vld [vmem:[%s220 + $0x1b0] sm:$0xff]
      %v283 = vld [vmem:[%s220 + $0x1b8] sm:$0xff]
      %v284 = vld [vmem:[%s220 + $0x1c0] sm:$0xff]
      %v285 = vld [vmem:[%s220 + $0x1c8] sm:$0xff]
      %v286 = vld [vmem:[%s220 + $0x1d0] sm:$0xff]
      %v287 = vld [vmem:[%s220 + $0x1d8] sm:$0xff]
      %v288 = vld [vmem:[%s220 + $0x1e0] sm:$0xff]
      %v289 = vld [vmem:[%s220 + $0x1e8] sm:$0xff]
      %v290 = vld [vmem:[%s220 + $0x1f0] sm:$0xff]
      %v291 = vld [vmem:[%s220 + $0x1f8] sm:$0xff]
      %vm292 = vcmp.ne.f32.partialorder %v228, %v228
      %vm293 = vcmp.ne.f32.partialorder %v229, %v229
      %vm294 = vcmp.ne.f32.partialorder %v230, %v230
      %vm295 = vcmp.ne.f32.partialorder %v231, %v231
      %vm296 = vcmp.ne.f32.partialorder %v232, %v232
      %vm297 = vcmp.ne.f32.partialorder %v233, %v233
      %vm298 = vcmp.ne.f32.partialorder %v234, %v234
      %vm299 = vcmp.ne.f32.partialorder %v235, %v235
      %vm300 = vcmp.ne.f32.partialorder %v236, %v236
      %vm301 = vcmp.ne.f32.partialorder %v237, %v237
      %vm302 = vcmp.ne.f32.partialorder %v238, %v238
      %vm303 = vcmp.ne.f32.partialorder %v239, %v239
      %vm304 = vcmp.ne.f32.partialorder %v240, %v240
      %vm305 = vcmp.ne.f32.partialorder %v241, %v241
      %vm306 = vcmp.ne.f32.partialorder %v242, %v242
      %vm307 = vcmp.ne.f32.partialorder %v243, %v243
      %vm308 = vcmp.ne.f32.partialorder %v244, %v244
      %vm309 = vcmp.ne.f32.partialorder %v245, %v245
      %vm310 = vcmp.ne.f32.partialorder %v246, %v246
      %vm311 = vcmp.ne.f32.partialorder %v247, %v247
      %vm312 = vcmp.ne.f32.partialorder %v248, %v248
      %vm313 = vcmp.ne.f32.partialorder %v249, %v249
      %vm314 = vcmp.ne.f32.partialorder %v250, %v250
      %vm315 = vcmp.ne.f32.partialorder %v251, %v251
      %vm316 = vcmp.ne.f32.partialorder %v252, %v252
      %vm317 = vcmp.ne.f32.partialorder %v253, %v253
      %vm318 = vcmp.ne.f32.partialorder %v254, %v254
      %vm319 = vcmp.ne.f32.partialorder %v255, %v255
      %vm320 = vcmp.ne.f32.partialorder %v256, %v256
      %vm321 = vcmp.ne.f32.partialorder %v257, %v257
      %vm322 = vcmp.ne.f32.partialorder %v258, %v258
      %vm323 = vcmp.ne.f32.partialorder %v259, %v259
      %vm324 = vcmp.ne.f32.partialorder %v260, %v260
      %vm325 = vcmp.ne.f32.partialorder %v261, %v261
      %vm326 = vcmp.ne.f32.partialorder %v262, %v262
      %vm327 = vcmp.ne.f32.partialorder %v263, %v263
      %vm328 = vcmp.ne.f32.partialorder %v264, %v264
      %vm329 = vcmp.ne.f32.partialorder %v265, %v265
      %vm330 = vcmp.ne.f32.partialorder %v266, %v266
      %vm331 = vcmp.ne.f32.partialorder %v267, %v267
      %vm332 = vcmp.ne.f32.partialorder %v268, %v268
      %vm333 = vcmp.ne.f32.partialorder %v269, %v269
      %vm334 = vcmp.ne.f32.partialorder %v270, %v270
      %vm335 = vcmp.ne.f32.partialorder %v271, %v271
      %vm336 = vcmp.ne.f32.partialorder %v272, %v272
      %vm337 = vcmp.ne.f32.partialorder %v273, %v273
      %vm338 = vcmp.ne.f32.partialorder %v274, %v274
      %vm339 = vcmp.ne.f32.partialorder %v275, %v275
      %vm340 = vcmp.ne.f32.partialorder %v276, %v276
      %vm341 = vcmp.ne.f32.partialorder %v277, %v277
      %vm342 = vcmp.ne.f32.partialorder %v278, %v278
      %vm343 = vcmp.ne.f32.partialorder %v279, %v279
      %vm344 = vcmp.ne.f32.partialorder %v280, %v280
      %vm345 = vcmp.ne.f32.partialorder %v281, %v281
      %vm346 = vcmp.ne.f32.partialorder %v282, %v282
      %vm347 = vcmp.ne.f32.partialorder %v283, %v283
      %vm348 = vcmp.ne.f32.partialorder %v284, %v284
      %vm349 = vcmp.ne.f32.partialorder %v285, %v285
      %vm350 = vcmp.ne.f32.partialorder %v286, %v286
      %vm351 = vcmp.ne.f32.partialorder %v287, %v287
      %vm352 = vcmp.ne.f32.partialorder %v288, %v288
      %vm353 = vcmp.ne.f32.partialorder %v289, %v289
      %vm354 = vcmp.ne.f32.partialorder %v290, %v290
      %vm355 = vcmp.ne.f32.partialorder %v291, %v291
      %vm356 = vmxor %vm292, 1
      %vm357 = vmxor %vm293, 1
      %vm358 = vmxor %vm294, 1
      %vm359 = vmxor %vm295, 1
      %vm360 = vmxor %vm296, 1
      %vm361 = vmxor %vm297, 1
      %vm362 = vmxor %vm298, 1
      %vm363 = vmxor %vm299, 1
      %vm364 = vmxor %vm300, 1
      %vm365 = vmxor %vm301, 1
      %vm366 = vmxor %vm302, 1
      %vm367 = vmxor %vm303, 1
      %vm368 = vmxor %vm304, 1
      %vm369 = vmxor %vm305, 1
      %vm370 = vmxor %vm306, 1
      %vm371 = vmxor %vm307, 1
      %vm372 = vmxor %vm308, 1
      %vm373 = vmxor %vm309, 1
      %vm374 = vmxor %vm310, 1
      %vm375 = vmxor %vm311, 1
      %vm376 = vmxor %vm312, 1
      %vm377 = vmxor %vm313, 1
      %vm378 = vmxor %vm314, 1
      %vm379 = vmxor %vm315, 1
      %vm380 = vmxor %vm316, 1
      %vm381 = vmxor %vm317, 1
      %vm382 = vmxor %vm318, 1
      %vm383 = vmxor %vm319, 1
      %vm384 = vmxor %vm320, 1
      %vm385 = vmxor %vm321, 1
      %vm386 = vmxor %vm322, 1
      %vm387 = vmxor %vm323, 1
      %vm388 = vmxor %vm324, 1
      %vm389 = vmxor %vm325, 1
      %vm390 = vmxor %vm326, 1
      %vm391 = vmxor %vm327, 1
      %vm392 = vmxor %vm328, 1
      %vm393 = vmxor %vm329, 1
      %vm394 = vmxor %vm330, 1
      %vm395 = vmxor %vm331, 1
      %vm396 = vmxor %vm332, 1
      %vm397 = vmxor %vm333, 1
      %vm398 = vmxor %vm334, 1
      %vm399 = vmxor %vm335, 1
      %vm400 = vmxor %vm336, 1
      %vm401 = vmxor %vm337, 1
      %vm402 = vmxor %vm338, 1
      %vm403 = vmxor %vm339, 1
      %vm404 = vmxor %vm340, 1
      %vm405 = vmxor %vm341, 1
      %vm406 = vmxor %vm342, 1
      %vm407 = vmxor %vm343, 1
      %vm408 = vmxor %vm344, 1
      %vm409 = vmxor %vm345, 1
      %vm410 = vmxor %vm346, 1
      %vm411 = vmxor %vm347, 1
      %vm412 = vmxor %vm348, 1
      %vm413 = vmxor %vm349, 1
      %vm414 = vmxor %vm350, 1
      %vm415 = vmxor %vm351, 1
      %vm416 = vmxor %vm352, 1
      %vm417 = vmxor %vm353, 1
      %vm418 = vmxor %vm354, 1
      %vm419 = vmxor %vm355, 1
      %v420 = vsel %vm356, 1, 0
      %v421 = vsel %vm357, 1, 0
      %v422 = vsel %vm358, 1, 0
      %v423 = vsel %vm359, 1, 0
      %v424 = vsel %vm360, 1, 0
      %v425 = vsel %vm361, 1, 0
      %v426 = vsel %vm362, 1, 0
      %v427 = vsel %vm363, 1, 0
      %v428 = vsel %vm364, 1, 0
      %v429 = vsel %vm365, 1, 0
      %v430 = vsel %vm366, 1, 0
      %v431 = vsel %vm367, 1, 0
      %v432 = vsel %vm368, 1, 0
      %v433 = vsel %vm369, 1, 0
      %v434 = vsel %vm370, 1, 0
      %v435 = vsel %vm371, 1, 0
      %v436 = vsel %vm372, 1, 0
      %v437 = vsel %vm373, 1, 0
      %v438 = vsel %vm374, 1, 0
      %v439 = vsel %vm375, 1, 0
      %v440 = vsel %vm376, 1, 0
      %v441 = vsel %vm377, 1, 0
      %v442 = vsel %vm378, 1, 0
      %v443 = vsel %vm379, 1, 0
      %v444 = vsel %vm380, 1, 0
      %v445 = vsel %vm381, 1, 0
      %v446 = vsel %vm382, 1, 0
      %v447 = vsel %vm383, 1, 0
      %v448 = vsel %vm384, 1, 0
      %v449 = vsel %vm385, 1, 0
      %v450 = vsel %vm386, 1, 0
      %v451 = vsel %vm387, 1, 0
      %v452 = vsel %vm388, 1, 0
      %v453 = vsel %vm389, 1, 0
      %v454 = vsel %vm390, 1, 0
      %v455 = vsel %vm391, 1, 0
      %v456 = vsel %vm392, 1, 0
      %v457 = vsel %vm393, 1, 0
      %v458 = vsel %vm394, 1, 0
      %v459 = vsel %vm395, 1, 0
      %v460 = vsel %vm396, 1, 0
      %v461 = vsel %vm397, 1, 0
      %v462 = vsel %vm398, 1, 0
      %v463 = vsel %vm399, 1, 0
      %v464 = vsel %vm400, 1, 0
      %v465 = vsel %vm401, 1, 0
      %v466 = vsel %vm402, 1, 0
      %v467 = vsel %vm403, 1, 0
      %v468 = vsel %vm404, 1, 0
      %v469 = vsel %vm405, 1, 0
      %v470 = vsel %vm406, 1, 0
      %v471 = vsel %vm407, 1, 0
      %v472 = vsel %vm408, 1, 0
      %v473 = vsel %vm409, 1, 0
      %v474 = vsel %vm410, 1, 0
      %v475 = vsel %vm411, 1, 0
      %v476 = vsel %vm412, 1, 0
      %v477 = vsel %vm413, 1, 0
      %v478 = vsel %vm414, 1, 0
      %v479 = vsel %vm415, 1, 0
      %v480 = vsel %vm416, 1, 0
      %v481 = vsel %vm417, 1, 0
      %v482 = vsel %vm418, 1, 0
      %v483 = vsel %vm419, 1, 0
      %v484 = vcvt.s32.f32 %v420
      %v485 = vcvt.s32.f32 %v421
      %v486 = vcvt.s32.f32 %v422
      %v487 = vcvt.s32.f32 %v423
      %v488 = vcvt.s32.f32 %v424
      %v489 = vcvt.s32.f32 %v425
      %v490 = vcvt.s32.f32 %v426
      %v491 = vcvt.s32.f32 %v427
      %v492 = vcvt.s32.f32 %v428
      %v493 = vcvt.s32.f32 %v429
      %v494 = vcvt.s32.f32 %v430
      %v495 = vcvt.s32.f32 %v431
      %v496 = vcvt.s32.f32 %v432
      %v497 = vcvt.s32.f32 %v433
      %v498 = vcvt.s32.f32 %v434
      %v499 = vcvt.s32.f32 %v435
      %v500 = vcvt.s32.f32 %v436
      %v501 = vcvt.s32.f32 %v437
      %v502 = vcvt.s32.f32 %v438
      %v503 = vcvt.s32.f32 %v439
      %v504 = vcvt.s32.f32 %v440
      %v505 = vcvt.s32.f32 %v441
      %v506 = vcvt.s32.f32 %v442
      %v507 = vcvt.s32.f32 %v443
      %v508 = vcvt.s32.f32 %v444
      %v509 = vcvt.s32.f32 %v445
      %v510 = vcvt.s32.f32 %v446
      %v511 = vcvt.s32.f32 %v447
      %v512 = vcvt.s32.f32 %v448
      %v513 = vcvt.s32.f32 %v449
      %v514 = vcvt.s32.f32 %v450
      %v515 = vcvt.s32.f32 %v451
      %v516 = vcvt.s32.f32 %v452
      %v517 = vcvt.s32.f32 %v453
      %v518 = vcvt.s32.f32 %v454
      %v519 = vcvt.s32.f32 %v455
      %v520 = vcvt.s32.f32 %v456
      %v521 = vcvt.s32.f32 %v457
      %v522 = vcvt.s32.f32 %v458
      %v523 = vcvt.s32.f32 %v459
      %v524 = vcvt.s32.f32 %v460
      %v525 = vcvt.s32.f32 %v461
      %v526 = vcvt.s32.f32 %v462
      %v527 = vcvt.s32.f32 %v463
      %v528 = vcvt.s32.f32 %v464
      %v529 = vcvt.s32.f32 %v465
      %v530 = vcvt.s32.f32 %v466
      %v531 = vcvt.s32.f32 %v467
      %v532 = vcvt.s32.f32 %v468
      %v533 = vcvt.s32.f32 %v469
      %v534 = vcvt.s32.f32 %v470
      %v535 = vcvt.s32.f32 %v471
      %v536 = vcvt.s32.f32 %v472
      %v537 = vcvt.s32.f32 %v473
      %v538 = vcvt.s32.f32 %v474
      %v539 = vcvt.s32.f32 %v475
      %v540 = vcvt.s32.f32 %v476
      %v541 = vcvt.s32.f32 %v477
      %v542 = vcvt.s32.f32 %v478
      %v543 = vcvt.s32.f32 %v479
      %v544 = vcvt.s32.f32 %v480
      %v545 = vcvt.s32.f32 %v481
      %v546 = vcvt.s32.f32 %v482
      %v547 = vcvt.s32.f32 %v483
      %v548 = vsel %vm292, 0.0, %v228
      %v549 = vsel %vm293, 0.0, %v229
      %v550 = vsel %vm294, 0.0, %v230
      %v551 = vsel %vm295, 0.0, %v231
      %v552 = vsel %vm296, 0.0, %v232
      %v553 = vsel %vm297, 0.0, %v233
      %v554 = vsel %vm298, 0.0, %v234
      %v555 = vsel %vm299, 0.0, %v235
      %v556 = vsel %vm300, 0.0, %v236
      %v557 = vsel %vm301, 0.0, %v237
      %v558 = vsel %vm302, 0.0, %v238
      %v559 = vsel %vm303, 0.0, %v239
      %v560 = vsel %vm304, 0.0, %v240
      %v561 = vsel %vm305, 0.0, %v241
      %v562 = vsel %vm306, 0.0, %v242
      %v563 = vsel %vm307, 0.0, %v243
      %v564 = vsel %vm308, 0.0, %v244
      %v565 = vsel %vm309, 0.0, %v245
      %v566 = vsel %vm310, 0.0, %v246
      %v567 = vsel %vm311, 0.0, %v247
      %v568 = vsel %vm312, 0.0, %v248
      %v569 = vsel %vm313, 0.0, %v249
      %v570 = vsel %vm314, 0.0, %v250
      %v571 = vsel %vm315, 0.0, %v251
      %v572 = vsel %vm316, 0.0, %v252
      %v573 = vsel %vm317, 0.0, %v253
      %v574 = vsel %vm318, 0.0, %v254
      %v575 = vsel %vm319, 0.0, %v255
      %v576 = vsel %vm320, 0.0, %v256
      %v577 = vsel %vm321, 0.0, %v257
      %v578 = vsel %vm322, 0.0, %v258
      %v579 = vsel %vm323, 0.0, %v259
      %v580 = vsel %vm324, 0.0, %v260
      %v581 = vsel %vm325, 0.0, %v261
      %v582 = vsel %vm326, 0.0, %v262
      %v583 = vsel %vm327, 0.0, %v263
      %v584 = vsel %vm328, 0.0, %v264
      %v585 = vsel %vm329, 0.0, %v265
      %v586 = vsel %vm330, 0.0, %v266
      %v587 = vsel %vm331, 0.0, %v267
      %v588 = vsel %vm332, 0.0, %v268
      %v589 = vsel %vm333, 0.0, %v269
      %v590 = vsel %vm334, 0.0, %v270
      %v591 = vsel %vm335, 0.0, %v271
      %v592 = vsel %vm336, 0.0, %v272
      %v593 = vsel %vm337, 0.0, %v273
      %v594 = vsel %vm338, 0.0, %v274
      %v595 = vsel %vm339, 0.0, %v275
      %v596 = vsel %vm340, 0.0, %v276
      %v597 = vsel %vm341, 0.0, %v277
      %v598 = vsel %vm342, 0.0, %v278
      %v599 = vsel %vm343, 0.0, %v279
      %v600 = vsel %vm344, 0.0, %v280
      %v601 = vsel %vm345, 0.0, %v281
      %v602 = vsel %vm346, 0.0, %v282
      %v603 = vsel %vm347, 0.0, %v283
      %v604 = vsel %vm348, 0.0, %v284
      %v605 = vsel %vm349, 0.0, %v285
      %v606 = vsel %vm350, 0.0, %v286
      %v607 = vsel %vm351, 0.0, %v287
      %v608 = vsel %vm352, 0.0, %v288
      %v609 = vsel %vm353, 0.0, %v289
      %v610 = vsel %vm354, 0.0, %v290
      %v611 = vsel %vm355, 0.0, %v291
      %v612 = vmax.f32 %v548, -3.4028235e+38
      %v613 = vmax.f32 %v549, -3.4028235e+38
      %v614 = vmax.f32 %v550, -3.4028235e+38
      %v615 = vmax.f32 %v551, -3.4028235e+38
      %v616 = vmax.f32 %v552, -3.4028235e+38
      %v617 = vmax.f32 %v553, -3.4028235e+38
      %v618 = vmax.f32 %v554, -3.4028235e+38
      %v619 = vmax.f32 %v555, -3.4028235e+38
      %v620 = vmax.f32 %v556, -3.4028235e+38
      %v621 = vmax.f32 %v557, -3.4028235e+38
      %v622 = vmax.f32 %v558, -3.4028235e+38
      %v623 = vmax.f32 %v559, -3.4028235e+38
      %v624 = vmax.f32 %v560, -3.4028235e+38
      %v625 = vmax.f32 %v561, -3.4028235e+38
      %v626 = vmax.f32 %v562, -3.4028235e+38
      %v627 = vmax.f32 %v563, -3.4028235e+38
      %v628 = vmax.f32 %v564, -3.4028235e+38
      %v629 = vmax.f32 %v565, -3.4028235e+38
      %v630 = vmax.f32 %v566, -3.4028235e+38
      %v631 = vmax.f32 %v567, -3.4028235e+38
      %v632 = vmax.f32 %v568, -3.4028235e+38
      %v633 = vmax.f32 %v569, -3.4028235e+38
      %v634 = vmax.f32 %v570, -3.4028235e+38
      %v635 = vmax.f32 %v571, -3.4028235e+38
      %v636 = vmax.f32 %v572, -3.4028235e+38
      %v637 = vmax.f32 %v573, -3.4028235e+38
      %v638 = vmax.f32 %v574, -3.4028235e+38
      %v639 = vmax.f32 %v575, -3.4028235e+38
      %v640 = vmax.f32 %v576, -3.4028235e+38
      %v641 = vmax.f32 %v577, -3.4028235e+38
      %v642 = vmax.f32 %v578, -3.4028235e+38
      %v643 = vmax.f32 %v579, -3.4028235e+38
      %v644 = vmax.f32 %v580, -3.4028235e+38
      %v645 = vmax.f32 %v581, -3.4028235e+38
      %v646 = vmax.f32 %v582, -3.4028235e+38
      %v647 = vmax.f32 %v583, -3.4028235e+38
      %v648 = vmax.f32 %v584, -3.4028235e+38
      %v649 = vmax.f32 %v585, -3.4028235e+38
      %v650 = vmax.f32 %v586, -3.4028235e+38
      %v651 = vmax.f32 %v587, -3.4028235e+38
      %v652 = vmax.f32 %v588, -3.4028235e+38
      %v653 = vmax.f32 %v589, -3.4028235e+38
      %v654 = vmax.f32 %v590, -3.4028235e+38
      %v655 = vmax.f32 %v591, -3.4028235e+38
      %v656 = vmax.f32 %v592, -3.4028235e+38
      %v657 = vmax.f32 %v593, -3.4028235e+38
      %v658 = vmax.f32 %v594, -3.4028235e+38
      %v659 = vmax.f32 %v595, -3.4028235e+38
      %v660 = vmax.f32 %v596, -3.4028235e+38
      %v661 = vmax.f32 %v597, -3.4028235e+38
      %v662 = vmax.f32 %v598, -3.4028235e+38
      %v663 = vmax.f32 %v599, -3.4028235e+38
      %v664 = vmax.f32 %v600, -3.4028235e+38
      %v665 = vmax.f32 %v601, -3.4028235e+38
      %v666 = vmax.f32 %v602, -3.4028235e+38
      %v667 = vmax.f32 %v603, -3.4028235e+38
      %v668 = vmax.f32 %v604, -3.4028235e+38
      %v669 = vmax.f32 %v605, -3.4028235e+38
      %v670 = vmax.f32 %v606, -3.4028235e+38
      %v671 = vmax.f32 %v607, -3.4028235e+38
      %v672 = vmax.f32 %v608, -3.4028235e+38
      %v673 = vmax.f32 %v609, -3.4028235e+38
      %v674 = vmax.f32 %v610, -3.4028235e+38
      %v675 = vmax.f32 %v611, -3.4028235e+38
      %v676 = vmin.f32 %v612, 3.4028235e+38
      %v677 = vmin.f32 %v613, 3.4028235e+38
      %v678 = vmin.f32 %v614, 3.4028235e+38
      %v679 = vmin.f32 %v615, 3.4028235e+38
      %v680 = vmin.f32 %v616, 3.4028235e+38
      %v681 = vmin.f32 %v617, 3.4028235e+38
      %v682 = vmin.f32 %v618, 3.4028235e+38
      %v683 = vmin.f32 %v619, 3.4028235e+38
      %v684 = vmin.f32 %v620, 3.4028235e+38
      %v685 = vmin.f32 %v621, 3.4028235e+38
      %v686 = vmin.f32 %v622, 3.4028235e+38
      %v687 = vmin.f32 %v623, 3.4028235e+38
      %v688 = vmin.f32 %v624, 3.4028235e+38
      %v689 = vmin.f32 %v625, 3.4028235e+38
      %v690 = vmin.f32 %v626, 3.4028235e+38
      %v691 = vmin.f32 %v627, 3.4028235e+38
      %v692 = vmin.f32 %v628, 3.4028235e+38
      %v693 = vmin.f32 %v629, 3.4028235e+38
      %v694 = vmin.f32 %v630, 3.4028235e+38
      %v695 = vmin.f32 %v631, 3.4028235e+38
      %v696 = vmin.f32 %v632, 3.4028235e+38
      %v697 = vmin.f32 %v633, 3.4028235e+38
      %v698 = vmin.f32 %v634, 3.4028235e+38
      %v699 = vmin.f32 %v635, 3.4028235e+38
      %v700 = vmin.f32 %v636, 3.4028235e+38
      %v701 = vmin.f32 %v637, 3.4028235e+38
      %v702 = vmin.f32 %v638, 3.4028235e+38
      %v703 = vmin.f32 %v639, 3.4028235e+38
      %v704 = vmin.f32 %v640, 3.4028235e+38
      %v705 = vmin.f32 %v641, 3.4028235e+38
      %v706 = vmin.f32 %v642, 3.4028235e+38
      %v707 = vmin.f32 %v643, 3.4028235e+38
      %v708 = vmin.f32 %v644, 3.4028235e+38
      %v709 = vmin.f32 %v645, 3.4028235e+38
      %v710 = vmin.f32 %v646, 3.4028235e+38
      %v711 = vmin.f32 %v647, 3.4028235e+38
      %v712 = vmin.f32 %v648, 3.4028235e+38
      %v713 = vmin.f32 %v649, 3.4028235e+38
      %v714 = vmin.f32 %v650, 3.4028235e+38
      %v715 = vmin.f32 %v651, 3.4028235e+38
      %v716 = vmin.f32 %v652, 3.4028235e+38
      %v717 = vmin.f32 %v653, 3.4028235e+38
      %v718 = vmin.f32 %v654, 3.4028235e+38
      %v719 = vmin.f32 %v655, 3.4028235e+38
      %v720 = vmin.f32 %v656, 3.4028235e+38
      %v721 = vmin.f32 %v657, 3.4028235e+38
      %v722 = vmin.f32 %v658, 3.4028235e+38
      %v723 = vmin.f32 %v659, 3.4028235e+38
      %v724 = vmin.f32 %v660, 3.4028235e+38
      %v725 = vmin.f32 %v661, 3.4028235e+38
      %v726 = vmin.f32 %v662, 3.4028235e+38
      %v727 = vmin.f32 %v663, 3.4028235e+38
      %v728 = vmin.f32 %v664, 3.4028235e+38
      %v729 = vmin.f32 %v665, 3.4028235e+38
      %v730 = vmin.f32 %v666, 3.4028235e+38
      %v731 = vmin.f32 %v667, 3.4028235e+38
      %v732 = vmin.f32 %v668, 3.4028235e+38
      %v733 = vmin.f32 %v669, 3.4028235e+38
      %v734 = vmin.f32 %v670, 3.4028235e+38
      %v735 = vmin.f32 %v671, 3.4028235e+38
      %v736 = vmin.f32 %v672, 3.4028235e+38
      %v737 = vmin.f32 %v673, 3.4028235e+38
      %v738 = vmin.f32 %v674, 3.4028235e+38
      %v739 = vmin.f32 %v675, 3.4028235e+38
      %v740 = vld [vmem:[%s1] sm:$0xff]
      %v741 = vld [vmem:[%s1 + $0x8] sm:$0xff]
      %vm742 = vcmask 130048
      %v744 = vsel %vm742, %v676, 0
      %v747 = vsel %vm742, %v677, 0
      %v750 = vsel %vm742, %v678, 0
      %v753 = vsel %vm742, %v679, 0
      %v756 = vsel %vm742, %v680, 0
      %v759 = vsel %vm742, %v681, 0
      %v762 = vsel %vm742, %v682, 0
      %v765 = vsel %vm742, %v683, 0
      %v768 = vsel %vm742, %v684, 0
      %v771 = vsel %vm742, %v685, 0
      %v774 = vsel %vm742, %v686, 0
      %v777 = vsel %vm742, %v687, 0
      %v780 = vsel %vm742, %v688, 0
      %v783 = vsel %vm742, %v689, 0
      %v786 = vsel %vm742, %v690, 0
      %v789 = vsel %vm742, %v691, 0
      %v792 = vsel %vm742, %v692, 0
      %v795 = vsel %vm742, %v693, 0
      %v798 = vsel %vm742, %v694, 0
      %v801 = vsel %vm742, %v695, 0
      %v804 = vsel %vm742, %v696, 0
      %v807 = vsel %vm742, %v697, 0
      %v810 = vsel %vm742, %v698, 0
      %v813 = vsel %vm742, %v699, 0
      %v816 = vsel %vm742, %v700, 0
      %v819 = vsel %vm742, %v701, 0
      %v822 = vsel %vm742, %v702, 0
      %v825 = vsel %vm742, %v703, 0
      %v828 = vsel %vm742, %v704, 0
      %v831 = vsel %vm742, %v705, 0
      %v834 = vsel %vm742, %v706, 0
      %v837 = vsel %vm742, %v707, 0
      %v840 = vsel %vm742, %v708, 0
      %v843 = vsel %vm742, %v709, 0
      %v846 = vsel %vm742, %v710, 0
      %v849 = vsel %vm742, %v711, 0
      %v852 = vsel %vm742, %v712, 0
      %v855 = vsel %vm742, %v713, 0
      %v858 = vsel %vm742, %v714, 0
      %v861 = vsel %vm742, %v715, 0
      %v864 = vsel %vm742, %v716, 0
      %v867 = vsel %vm742, %v717, 0
      %v870 = vsel %vm742, %v718, 0
      %v873 = vsel %vm742, %v719, 0
      %v876 = vsel %vm742, %v720, 0
      %v879 = vsel %vm742, %v721, 0
      %v882 = vsel %vm742, %v722, 0
      %v885 = vsel %vm742, %v723, 0
      %v888 = vsel %vm742, %v724, 0
      %v891 = vsel %vm742, %v725, 0
      %v894 = vsel %vm742, %v726, 0
      %v897 = vsel %vm742, %v727, 0
      %v900 = vsel %vm742, %v728, 0
      %v903 = vsel %vm742, %v729, 0
      %v906 = vsel %vm742, %v730, 0
      %v909 = vsel %vm742, %v731, 0
      %v912 = vsel %vm742, %v732, 0
      %v915 = vsel %vm742, %v733, 0
      %v918 = vsel %vm742, %v734, 0
      %v921 = vsel %vm742, %v735, 0
      %v924 = vsel %vm742, %v736, 0
      %v927 = vsel %vm742, %v737, 0
      %v930 = vsel %vm742, %v738, 0
      %v933 = vsel %vm742, %v739, 0
      %935 = vmatprep.subr.mxu0 0.0
      %936 = vmatpush1.msra.mxu0 %v740
      %937 = vmatprep.subr.mxu0 0.0
      %938 = vmatpush1.msra.mxu0 %v741
      %939 = vmatprep.subr.mxu0 0.0
      %940 = vmatpush1.msra.mxu0 0.0
      %941 = vmatprep.subr.mxu0 0.0
      %942 = vmatpush1.msra.mxu0 0.0
      %943 = vmatprep.subr.mxu0 0.0
      %944 = vmatpush1.msra.mxu0 0.0
      %945 = vmatprep.subr.mxu0 0.0
      %946 = vmatpush1.msra.mxu0 0.0
      %947 = vmatprep.subr.mxu0 0.0
      %948 = vmatpush1.msra.mxu0 0.0
      %949 = vmatprep.subr.mxu0 0.0
      %950 = vmatpush1.msra.mxu0 0.0
      %951 = vmatprep.subr.mxu0 0.0
      %952 = vmatpush1.msra.mxu0 0.0
      %953 = vmatprep.subr.mxu0 0.0
      %954 = vmatpush1.msra.mxu0 0.0
      %955 = vmatprep.subr.mxu0 0.0
      %956 = vmatpush1.msra.mxu0 0.0
      %957 = vmatprep.subr.mxu0 0.0
      %958 = vmatpush1.msra.mxu0 0.0
      %959 = vmatprep.subr.mxu0 0.0
      %960 = vmatpush1.msra.mxu0 0.0
      %961 = vmatprep.subr.mxu0 0.0
      %962 = vmatpush1.msra.mxu0 0.0
      %963 = vmatprep.subr.mxu0 0.0
      %964 = vmatpush1.msra.mxu0 0.0
      %965 = vmatprep.subr.mxu0 0.0
      %966 = vmatpush1.msra.mxu0 0.0
      %967 = vmatprep.subr.mxu0 0.0
      %968 = vmatpush1.msra.mxu0 0.0
      %969 = vmatprep.subr.mxu0 0.0
      %970 = vmatpush1.msra.mxu0 0.0
      %971 = vmatprep.subr.mxu0 0.0
      %972 = vmatpush1.msra.mxu0 0.0
      %973 = vmatprep.subr.mxu0 0.0
      %974 = vmatpush1.msra.mxu0 0.0
      %975 = vmatprep.subr.mxu0 0.0
      %976 = vmatpush1.msra.mxu0 0.0
      %977 = vmatprep.subr.mxu0 0.0
      %978 = vmatpush1.msra.mxu0 0.0
      %979 = vmatprep.subr.mxu0 0.0
      %980 = vmatpush1.msra.mxu0 0.0
      %981 = vmatprep.subr.mxu0 0.0
      %982 = vmatpush1.msra.mxu0 0.0
      %983 = vmatprep.subr.mxu0 0.0
      %984 = vmatpush1.msra.mxu0 0.0
      %985 = vmatprep.subr.mxu0 0.0
      %986 = vmatpush1.msra.mxu0 0.0
      %987 = vmatprep.subr.mxu0 0.0
      %988 = vmatpush1.msra.mxu0 0.0
      %989 = vmatprep.subr.mxu0 0.0
      %990 = vmatpush1.msra.mxu0 0.0
      %991 = vmatprep.subr.mxu0 0.0
      %992 = vmatpush1.msra.mxu0 0.0
      %993 = vmatprep.subr.mxu0 0.0
      %994 = vmatpush1.msra.mxu0 0.0
      %995 = vmatprep.subr.mxu0 0.0
      %996 = vmatpush1.msra.mxu0 0.0
      %997 = vmatprep.subr.mxu0 0.0
      %998 = vmatpush1.msra.mxu0 0.0
      %999 = vmatprep.mubr.f32.mxu0 0.0
      %1000 = vmatmul.mubr.f32.gmra.mrb[0].mxu0 %v744
      %v1001 = vpop.f32.mrb[0].mxu0
      %v1002 = vadd.f32 0.0, %v1001
      %v1003 = vpop.f32.mrb[0].mxu0
      %1004 = vmatprep.mubr.f32.mxu0 0.0
      %1005 = vmatmul.mubr.f32.gmra.mrb[0].mxu0 %v747
      %v1006 = vpop.f32.mrb[0].mxu0
      %v1007 = vadd.f32 0.0, %v1006
      %v1008 = vpop.f32.mrb[0].mxu0
      %1009 = vmatprep.mubr.f32.mxu0 0.0
      %1010 = vmatmul.mubr.f32.gmra.mrb[0].mxu0 %v750
      %v1011 = vpop.f32.mrb[0].mxu0
      %v1012 = vadd.f32 0.0, %v1011
      %v1013 = vpop.f32.mrb[0].mxu0
      %1014 = vmatprep.mubr.f32.mxu0 0.0
      %1015 = vmatmul.mubr.f32.gmra.mrb[0].mxu0 %v753
      %v1016 = vpop.f32.mrb[0].mxu0
      %v1017 = vadd.f32 0.0, %v1016
      %v1018 = vpop.f32.mrb[0].mxu0
      %1019 = vmatprep.mubr.f32.mxu0 0.0
      %1020 = vmatmul.mubr.f32.gmra.mrb[0].mxu0 %v756
      %v1021 = vpop.f32.mrb[0].mxu0
      %v1022 = vadd.f32 0.0, %v1021
      %v1023 = vpop.f32.mrb[0].mxu0
      %1024 = vmatprep.mubr.f32.mxu0 0.0
      %1025 = vmatmul.mubr.f32.gmra.mrb[0].mxu0 %v759
      %v1026 = vpop.f32.mrb[0].mxu0
      %v1027 = vadd.f32 0.0, %v1026
      %v1028 = vpop.f32.mrb[0].mxu0
      %1029 = vmatprep.mubr.f32.mxu0 0.0
      %1030 = vmatmul.mubr.f32.gmra.mrb[0].mxu0 %v762
      %v1031 = vpop.f32.mrb[0].mxu0
      %v1032 = vadd.f32 0.0, %v1031
      %v1033 = vpop.f32.mrb[0].mxu0
      %1034 = vmatprep.mubr.f32.mxu0 0.0
      %1035 = vmatmul.mubr.f32.gmra.mrb[0].mxu0 %v765
      %v1036 = vpop.f32.mrb[0].mxu0
      %v1037 = vadd.f32 0.0, %v1036
      %v1038 = vpop.f32.mrb[0].mxu0
      %1039 = vmatprep.mubr.f32.mxu0 0.0
      %1040 = vmatmul.mubr.f32.gmra.mrb[0].mxu0 %v768
      %v1041 = vpop.f32.mrb[0].mxu0
      %v1042 = vadd.f32 0.0, %v1041
      %v1043 = vpop.f32.mrb[0].mxu0
      %1044 = vmatprep.mubr.f32.mxu0 0.0
      %1045 = vmatmul.mubr.f32.gmra.mrb[0].mxu0 %v771
      %v1046 = vpop.f32.mrb[0].mxu0
      %v1047 = vadd.f32 0.0, %v1046
      %v1048 = vpop.f32.mrb[0].mxu0
      %1049 = vmatprep.mubr.f32.mxu0 0.0
      %1050 = vmatmul.mubr.f32.gmra.mrb[0].mxu0 %v774
      %v1051 = vpop.f32.mrb[0].mxu0
      %v1052 = vadd.f32 0.0, %v1051
      %v1053 = vpop.f32.mrb[0].mxu0
      %1054 = vmatprep.mubr.f32.mxu0 0.0
      %1055 = vmatmul.mubr.f32.gmra.mrb[0].mxu0 %v777
      %v1056 = vpop.f32.mrb[0].mxu0
      %v1057 = vadd.f32 0.0, %v1056
      %v1058 = vpop.f32.mrb[0].mxu0
      %1059 = vmatprep.mubr.f32.mxu0 0.0
      %1060 = vmatmul.mubr.f32.gmra.mrb[0].mxu0 %v780
      %v1061 = vpop.f32.mrb[0].mxu0
      %v1062 = vadd.f32 0.0, %v1061
      %v1063 = vpop.f32.mrb[0].mxu0
      %1064 = vmatprep.mubr.f32.mxu0 0.0
      %1065 = vmatmul.mubr.f32.gmra.mrb[0].mxu0 %v783
      %v1066 = vpop.f32.mrb[0].mxu0
      %v1067 = vadd.f32 0.0, %v1066
      %v1068 = vpop.f32.mrb[0].mxu0
      %1069 = vmatprep.mubr.f32.mxu0 0.0
      %1070 = vmatmul.mubr.f32.gmra.mrb[0].mxu0 %v786
      %v1071 = vpop.f32.mrb[0].mxu0
      %v1072 = vadd.f32 0.0, %v1071
      %v1073 = vpop.f32.mrb[0].mxu0
      %1074 = vmatprep.mubr.f32.mxu0 0.0
      %1075 = vmatmul.mubr.f32.gmra.mrb[0].mxu0 %v789
      %v1076 = vpop.f32.mrb[0].mxu0
      %v1077 = vadd.f32 0.0, %v1076
      %v1078 = vpop.f32.mrb[0].mxu0
      %1079 = vmatprep.mubr.f32.mxu0 0.0
      %1080 = vmatmul.mubr.f32.gmra.mrb[0].mxu0 %v792
      %v1081 = vpop.f32.mrb[0].mxu0
      %v1082 = vadd.f32 0.0, %v1081
      %v1083 = vpop.f32.mrb[0].mxu0
      %1084 = vmatprep.mubr.f32.mxu0 0.0
      %1085 = vmatmul.mubr.f32.gmra.mrb[0].mxu0 %v795
      %v1086 = vpop.f32.mrb[0].mxu0
      %v1087 = vadd.f32 0.0, %v1086
      %v1088 = vpop.f32.mrb[0].mxu0
      %1089 = vmatprep.mubr.f32.mxu0 0.0
      %1090 = vmatmul.mubr.f32.gmra.mrb[0].mxu0 %v798
      %v1091 = vpop.f32.mrb[0].mxu0
      %v1092 = vadd.f32 0.0, %v1091
      %v1093 = vpop.f32.mrb[0].mxu0
      %1094 = vmatprep.mubr.f32.mxu0 0.0
      %1095 = vmatmul.mubr.f32.gmra.mrb[0].mxu0 %v801
      %v1096 = vpop.f32.mrb[0].mxu0
      %v1097 = vadd.f32 0.0, %v1096
      %v1098 = vpop.f32.mrb[0].mxu0
      %1099 = vmatprep.mubr.f32.mxu0 0.0
      %1100 = vmatmul.mubr.f32.gmra.mrb[0].mxu0 %v804
      %v1101 = vpop.f32.mrb[0].mxu0
      %v1102 = vadd.f32 0.0, %v1101
      %v1103 = vpop.f32.mrb[0].mxu0
      %1104 = vmatprep.mubr.f32.mxu0 0.0
      %1105 = vmatmul.mubr.f32.gmra.mrb[0].mxu0 %v807
      %v1106 = vpop.f32.mrb[0].mxu0
      %v1107 = vadd.f32 0.0, %v1106
      %v1108 = vpop.f32.mrb[0].mxu0
      %1109 = vmatprep.mubr.f32.mxu0 0.0
      %1110 = vmatmul.mubr.f32.gmra.mrb[0].mxu0 %v810
      %v1111 = vpop.f32.mrb[0].mxu0
      %v1112 = vadd.f32 0.0, %v1111
      %v1113 = vpop.f32.mrb[0].mxu0
      %1114 = vmatprep.mubr.f32.mxu0 0.0
      %1115 = vmatmul.mubr.f32.gmra.mrb[0].mxu0 %v813
      %v1116 = vpop.f32.mrb[0].mxu0
      %v1117 = vadd.f32 0.0, %v1116
      %v1118 = vpop.f32.mrb[0].mxu0
      %1119 = vmatprep.mubr.f32.mxu0 0.0
      %1120 = vmatmul.mubr.f32.gmra.mrb[0].mxu0 %v816
      %v1121 = vpop.f32.mrb[0].mxu0
      %v1122 = vadd.f32 0.0, %v1121
      %v1123 = vpop.f32.mrb[0].mxu0
      %1124 = vmatprep.mubr.f32.mxu0 0.0
      %1125 = vmatmul.mubr.f32.gmra.mrb[0].mxu0 %v819
      %v1126 = vpop.f32.mrb[0].mxu0
      %v1127 = vadd.f32 0.0, %v1126
      %v1128 = vpop.f32.mrb[0].mxu0
      %1129 = vmatprep.mubr.f32.mxu0 0.0
      %1130 = vmatmul.mubr.f32.gmra.mrb[0].mxu0 %v822
      %v1131 = vpop.f32.mrb[0].mxu0
      %v1132 = vadd.f32 0.0, %v1131
      %v1133 = vpop.f32.mrb[0].mxu0
      %1134 = vmatprep.mubr.f32.mxu0 0.0
      %1135 = vmatmul.mubr.f32.gmra.mrb[0].mxu0 %v825
      %v1136 = vpop.f32.mrb[0].mxu0
      %v1137 = vadd.f32 0.0, %v1136
      %v1138 = vpop.f32.mrb[0].mxu0
      %1139 = vmatprep.mubr.f32.mxu0 0.0
      %1140 = vmatmul.mubr.f32.gmra.mrb[0].mxu0 %v828
      %v1141 = vpop.f32.mrb[0].mxu0
      %v1142 = vadd.f32 0.0, %v1141
      %v1143 = vpop.f32.mrb[0].mxu0
      %1144 = vmatprep.mubr.f32.mxu0 0.0
      %1145 = vmatmul.mubr.f32.gmra.mrb[0].mxu0 %v831
      %v1146 = vpop.f32.mrb[0].mxu0
      %v1147 = vadd.f32 0.0, %v1146
      %v1148 = vpop.f32.mrb[0].mxu0
      %1149 = vmatprep.mubr.f32.mxu0 0.0
      %1150 = vmatmul.mubr.f32.gmra.mrb[0].mxu0 %v834
      %v1151 = vpop.f32.mrb[0].mxu0
      %v1152 = vadd.f32 0.0, %v1151
      %v1153 = vpop.f32.mrb[0].mxu0
      %1154 = vmatprep.mubr.f32.mxu0 0.0
      %1155 = vmatmul.mubr.f32.gmra.mrb[0].mxu0 %v837
      %v1156 = vpop.f32.mrb[0].mxu0
      %v1157 = vadd.f32 0.0, %v1156
      %v1158 = vpop.f32.mrb[0].mxu0
      %1159 = vmatprep.mubr.f32.mxu0 0.0
      %1160 = vmatmul.mubr.f32.gmra.mrb[0].mxu0 %v840
      %v1161 = vpop.f32.mrb[0].mxu0
      %v1162 = vadd.f32 0.0, %v1161
      %v1163 = vpop.f32.mrb[0].mxu0
      %1164 = vmatprep.mubr.f32.mxu0 0.0
      %1165 = vmatmul.mubr.f32.gmra.mrb[0].mxu0 %v843
      %v1166 = vpop.f32.mrb[0].mxu0
      %v1167 = vadd.f32 0.0, %v1166
      %v1168 = vpop.f32.mrb[0].mxu0
      %1169 = vmatprep.mubr.f32.mxu0 0.0
      %1170 = vmatmul.mubr.f32.gmra.mrb[0].mxu0 %v846
      %v1171 = vpop.f32.mrb[0].mxu0
      %v1172 = vadd.f32 0.0, %v1171
      %v1173 = vpop.f32.mrb[0].mxu0
      %1174 = vmatprep.mubr.f32.mxu0 0.0
      %1175 = vmatmul.mubr.f32.gmra.mrb[0].mxu0 %v849
      %v1176 = vpop.f32.mrb[0].mxu0
      %v1177 = vadd.f32 0.0, %v1176
      %v1178 = vpop.f32.mrb[0].mxu0
      %1179 = vmatprep.mubr.f32.mxu0 0.0
      %1180 = vmatmul.mubr.f32.gmra.mrb[0].mxu0 %v852
      %v1181 = vpop.f32.mrb[0].mxu0
      %v1182 = vadd.f32 0.0, %v1181
      %v1183 = vpop.f32.mrb[0].mxu0
      %1184 = vmatprep.mubr.f32.mxu0 0.0
      %1185 = vmatmul.mubr.f32.gmra.mrb[0].mxu0 %v855
      %v1186 = vpop.f32.mrb[0].mxu0
      %v1187 = vadd.f32 0.0, %v1186
      %v1188 = vpop.f32.mrb[0].mxu0
      %1189 = vmatprep.mubr.f32.mxu0 0.0
      %1190 = vmatmul.mubr.f32.gmra.mrb[0].mxu0 %v858
      %v1191 = vpop.f32.mrb[0].mxu0
      %v1192 = vadd.f32 0.0, %v1191
      %v1193 = vpop.f32.mrb[0].mxu0
      %1194 = vmatprep.mubr.f32.mxu0 0.0
      %1195 = vmatmul.mubr.f32.gmra.mrb[0].mxu0 %v861
      %v1196 = vpop.f32.mrb[0].mxu0
      %v1197 = vadd.f32 0.0, %v1196
      %v1198 = vpop.f32.mrb[0].mxu0
      %1199 = vmatprep.mubr.f32.mxu0 0.0
      %1200 = vmatmul.mubr.f32.gmra.mrb[0].mxu0 %v864
      %v1201 = vpop.f32.mrb[0].mxu0
      %v1202 = vadd.f32 0.0, %v1201
      %v1203 = vpop.f32.mrb[0].mxu0
      %1204 = vmatprep.mubr.f32.mxu0 0.0
      %1205 = vmatmul.mubr.f32.gmra.mrb[0].mxu0 %v867
      %v1206 = vpop.f32.mrb[0].mxu0
      %v1207 = vadd.f32 0.0, %v1206
      %v1208 = vpop.f32.mrb[0].mxu0
      %1209 = vmatprep.mubr.f32.mxu0 0.0
      %1210 = vmatmul.mubr.f32.gmra.mrb[0].mxu0 %v870
      %v1211 = vpop.f32.mrb[0].mxu0
      %v1212 = vadd.f32 0.0, %v1211
      %v1213 = vpop.f32.mrb[0].mxu0
      %1214 = vmatprep.mubr.f32.mxu0 0.0
      %1215 = vmatmul.mubr.f32.gmra.mrb[0].mxu0 %v873
      %v1216 = vpop.f32.mrb[0].mxu0
      %v1217 = vadd.f32 0.0, %v1216
      %v1218 = vpop.f32.mrb[0].mxu0
      %1219 = vmatprep.mubr.f32.mxu0 0.0
      %1220 = vmatmul.mubr.f32.gmra.mrb[0].mxu0 %v876
      %v1221 = vpop.f32.mrb[0].mxu0
      %v1222 = vadd.f32 0.0, %v1221
      %v1223 = vpop.f32.mrb[0].mxu0
      %1224 = vmatprep.mubr.f32.mxu0 0.0
      %1225 = vmatmul.mubr.f32.gmra.mrb[0].mxu0 %v879
      %v1226 = vpop.f32.mrb[0].mxu0
      %v1227 = vadd.f32 0.0, %v1226
      %v1228 = vpop.f32.mrb[0].mxu0
      %1229 = vmatprep.mubr.f32.mxu0 0.0
      %1230 = vmatmul.mubr.f32.gmra.mrb[0].mxu0 %v882
      %v1231 = vpop.f32.mrb[0].mxu0
      %v1232 = vadd.f32 0.0, %v1231
      %v1233 = vpop.f32.mrb[0].mxu0
      %1234 = vmatprep.mubr.f32.mxu0 0.0
      %1235 = vmatmul.mubr.f32.gmra.mrb[0].mxu0 %v885
      %v1236 = vpop.f32.mrb[0].mxu0
      %v1237 = vadd.f32 0.0, %v1236
      %v1238 = vpop.f32.mrb[0].mxu0
      %1239 = vmatprep.mubr.f32.mxu0 0.0
      %1240 = vmatmul.mubr.f32.gmra.mrb[0].mxu0 %v888
      %v1241 = vpop.f32.mrb[0].mxu0
      %v1242 = vadd.f32 0.0, %v1241
      %v1243 = vpop.f32.mrb[0].mxu0
      %1244 = vmatprep.mubr.f32.mxu0 0.0
      %1245 = vmatmul.mubr.f32.gmra.mrb[0].mxu0 %v891
      %v1246 = vpop.f32.mrb[0].mxu0
      %v1247 = vadd.f32 0.0, %v1246
      %v1248 = vpop.f32.mrb[0].mxu0
      %1249 = vmatprep.mubr.f32.mxu0 0.0
      %1250 = vmatmul.mubr.f32.gmra.mrb[0].mxu0 %v894
      %v1251 = vpop.f32.mrb[0].mxu0
      %v1252 = vadd.f32 0.0, %v1251
      %v1253 = vpop.f32.mrb[0].mxu0
      %1254 = vmatprep.mubr.f32.mxu0 0.0
      %1255 = vmatmul.mubr.f32.gmra.mrb[0].mxu0 %v897
      %v1256 = vpop.f32.mrb[0].mxu0
      %v1257 = vadd.f32 0.0, %v1256
      %v1258 = vpop.f32.mrb[0].mxu0
      %1259 = vmatprep.mubr.f32.mxu0 0.0
      %1260 = vmatmul.mubr.f32.gmra.mrb[0].mxu0 %v900
      %v1261 = vpop.f32.mrb[0].mxu0
      %v1262 = vadd.f32 0.0, %v1261
      %v1263 = vpop.f32.mrb[0].mxu0
      %1264 = vmatprep.mubr.f32.mxu0 0.0
      %1265 = vmatmul.mubr.f32.gmra.mrb[0].mxu0 %v903
      %v1266 = vpop.f32.mrb[0].mxu0
      %v1267 = vadd.f32 0.0, %v1266
      %v1268 = vpop.f32.mrb[0].mxu0
      %1269 = vmatprep.mubr.f32.mxu0 0.0
      %1270 = vmatmul.mubr.f32.gmra.mrb[0].mxu0 %v906
      %v1271 = vpop.f32.mrb[0].mxu0
      %v1272 = vadd.f32 0.0, %v1271
      %v1273 = vpop.f32.mrb[0].mxu0
      %1274 = vmatprep.mubr.f32.mxu0 0.0
      %1275 = vmatmul.mubr.f32.gmra.mrb[0].mxu0 %v909
      %v1276 = vpop.f32.mrb[0].mxu0
      %v1277 = vadd.f32 0.0, %v1276
      %v1278 = vpop.f32.mrb[0].mxu0
      %1279 = vmatprep.mubr.f32.mxu0 0.0
      %1280 = vmatmul.mubr.f32.gmra.mrb[0].mxu0 %v912
      %v1281 = vpop.f32.mrb[0].mxu0
      %v1282 = vadd.f32 0.0, %v1281
      %v1283 = vpop.f32.mrb[0].mxu0
      %1284 = vmatprep.mubr.f32.mxu0 0.0
      %1285 = vmatmul.mubr.f32.gmra.mrb[0].mxu0 %v915
      %v1286 = vpop.f32.mrb[0].mxu0
      %v1287 = vadd.f32 0.0, %v1286
      %v1288 = vpop.f32.mrb[0].mxu0
      %1289 = vmatprep.mubr.f32.mxu0 0.0
      %1290 = vmatmul.mubr.f32.gmra.mrb[0].mxu0 %v918
      %v1291 = vpop.f32.mrb[0].mxu0
      %v1292 = vadd.f32 0.0, %v1291
      %v1293 = vpop.f32.mrb[0].mxu0
      %1294 = vmatprep.mubr.f32.mxu0 0.0
      %1295 = vmatmul.mubr.f32.gmra.mrb[0].mxu0 %v921
      %v1296 = vpop.f32.mrb[0].mxu0
      %v1297 = vadd.f32 0.0, %v1296
      %v1298 = vpop.f32.mrb[0].mxu0
      %1299 = vmatprep.mubr.f32.mxu0 0.0
      %1300 = vmatmul.mubr.f32.gmra.mrb[0].mxu0 %v924
      %v1301 = vpop.f32.mrb[0].mxu0
      %v1302 = vadd.f32 0.0, %v1301
      %v1303 = vpop.f32.mrb[0].mxu0
      %1304 = vmatprep.mubr.f32.mxu0 0.0
      %1305 = vmatmul.mubr.f32.gmra.mrb[0].mxu0 %v927
      %v1306 = vpop.f32.mrb[0].mxu0
      %v1307 = vadd.f32 0.0, %v1306
      %v1308 = vpop.f32.mrb[0].mxu0
      %1309 = vmatprep.mubr.f32.mxu0 0.0
      %1310 = vmatmul.mubr.f32.gmra.mrb[0].mxu0 %v930
      %v1311 = vpop.f32.mrb[0].mxu0
      %v1312 = vadd.f32 0.0, %v1311
      %v1313 = vpop.f32.mrb[0].mxu0
      %1314 = vmatprep.mubr.f32.mxu0 0.0
      %1315 = vmatmul.mubr.f32.gmra.mrb[0].mxu0 %v933
      %v1316 = vpop.f32.mrb[0].mxu0
      %v1317 = vadd.f32 0.0, %v1316
      %v1318 = vpop.f32.mrb[0].mxu0
      %1319 = vdwg.mxu0
      %v1320 = vld [vmem:[%s2] sm:$0xff]
      %v1321 = vld [vmem:[%s2 + $0x8] sm:$0xff]
      %v1323 = vsel %vm742, %v484, 0
      %v1326 = vsel %vm742, %v485, 0
      %v1329 = vsel %vm742, %v486, 0
      %v1332 = vsel %vm742, %v487, 0
      %v1335 = vsel %vm742, %v488, 0
      %v1338 = vsel %vm742, %v489, 0
      %v1341 = vsel %vm742, %v490, 0
      %v1344 = vsel %vm742, %v491, 0
      %v1347 = vsel %vm742, %v492, 0
      %v1350 = vsel %vm742, %v493, 0
      %v1353 = vsel %vm742, %v494, 0
      %v1356 = vsel %vm742, %v495, 0
      %v1359 = vsel %vm742, %v496, 0
      %v1362 = vsel %vm742, %v497, 0
      %v1365 = vsel %vm742, %v498, 0
      %v1368 = vsel %vm742, %v499, 0
      %v1371 = vsel %vm742, %v500, 0
      %v1374 = vsel %vm742, %v501, 0
      %v1377 = vsel %vm742, %v502, 0
      %v1380 = vsel %vm742, %v503, 0
      %v1383 = vsel %vm742, %v504, 0
      %v1386 = vsel %vm742, %v505, 0
      %v1389 = vsel %vm742, %v506, 0
      %v1392 = vsel %vm742, %v507, 0
      %v1395 = vsel %vm742, %v508, 0
      %v1398 = vsel %vm742, %v509, 0
      %v1401 = vsel %vm742, %v510, 0
      %v1404 = vsel %vm742, %v511, 0
      %v1407 = vsel %vm742, %v512, 0
      %v1410 = vsel %vm742, %v513, 0
      %v1413 = vsel %vm742, %v514, 0
      %v1416 = vsel %vm742, %v515, 0
      %v1419 = vsel %vm742, %v516, 0
      %v1422 = vsel %vm742, %v517, 0
      %v1425 = vsel %vm742, %v518, 0
      %v1428 = vsel %vm742, %v519, 0
      %v1431 = vsel %vm742, %v520, 0
      %v1434 = vsel %vm742, %v521, 0
      %v1437 = vsel %vm742, %v522, 0
      %v1440 = vsel %vm742, %v523, 0
      %v1443 = vsel %vm742, %v524, 0
      %v1446 = vsel %vm742, %v525, 0
      %v1449 = vsel %vm742, %v526, 0
      %v1452 = vsel %vm742, %v527, 0
      %v1455 = vsel %vm742, %v528, 0
      %v1458 = vsel %vm742, %v529, 0
      %v1461 = vsel %vm742, %v530, 0
      %v1464 = vsel %vm742, %v531, 0
      %v1467 = vsel %vm742, %v532, 0
      %v1470 = vsel %vm742, %v533, 0
      %v1473 = vsel %vm742, %v534, 0
      %v1476 = vsel %vm742, %v535, 0
      %v1479 = vsel %vm742, %v536, 0
      %v1482 = vsel %vm742, %v537, 0
      %v1485 = vsel %vm742, %v538, 0
      %v1488 = vsel %vm742, %v539, 0
      %v1491 = vsel %vm742, %v540, 0
      %v1494 = vsel %vm742, %v541, 0
      %v1497 = vsel %vm742, %v542, 0
      %v1500 = vsel %vm742, %v543, 0
      %v1503 = vsel %vm742, %v544, 0
      %v1506 = vsel %vm742, %v545, 0
      %v1509 = vsel %vm742, %v546, 0
      %v1512 = vsel %vm742, %v547, 0
      %1514 = vmatprep.subr.mxu0 0.0
      %1515 = vmatpush1.msra.mxu0 %v1320
      %1516 = vmatprep.subr.mxu0 0.0
      %1517 = vmatpush1.msra.mxu0 %v1321
      %1518 = vmatprep.subr.mxu0 0.0
      %1519 = vmatpush1.msra.mxu0 0.0
      %1520 = vmatprep.subr.mxu0 0.0
      %1521 = vmatpush1.msra.mxu0 0.0
      %1522 = vmatprep.subr.mxu0 0.0
      %1523 = vmatpush1.msra.mxu0 0.0
      %1524 = vmatprep.subr.mxu0 0.0
      %1525 = vmatpush1.msra.mxu0 0.0
      %1526 = vmatprep.subr.mxu0 0.0
      %1527 = vmatpush1.msra.mxu0 0.0
      %1528 = vmatprep.subr.mxu0 0.0
      %1529 = vmatpush1.msra.mxu0 0.0
      %1530 = vmatprep.subr.mxu0 0.0
      %1531 = vmatpush1.msra.mxu0 0.0
      %1532 = vmatprep.subr.mxu0 0.0
      %1533 = vmatpush1.msra.mxu0 0.0
      %1534 = vmatprep.subr.mxu0 0.0
      %1535 = vmatpush1.msra.mxu0 0.0
      %1536 = vmatprep.subr.mxu0 0.0
      %1537 = vmatpush1.msra.mxu0 0.0
      %1538 = vmatprep.subr.mxu0 0.0
      %1539 = vmatpush1.msra.mxu0 0.0
      %1540 = vmatprep.subr.mxu0 0.0
      %1541 = vmatpush1.msra.mxu0 0.0
      %1542 = vmatprep.subr.mxu0 0.0
      %1543 = vmatpush1.msra.mxu0 0.0
      %1544 = vmatprep.subr.mxu0 0.0
      %1545 = vmatpush1.msra.mxu0 0.0
      %1546 = vmatprep.subr.mxu0 0.0
      %1547 = vmatpush1.msra.mxu0 0.0
      %1548 = vmatprep.subr.mxu0 0.0
      %1549 = vmatpush1.msra.mxu0 0.0
      %1550 = vmatprep.subr.mxu0 0.0
      %1551 = vmatpush1.msra.mxu0 0.0
      %1552 = vmatprep.subr.mxu0 0.0
      %1553 = vmatpush1.msra.mxu0 0.0
      %1554 = vmatprep.subr.mxu0 0.0
      %1555 = vmatpush1.msra.mxu0 0.0
      %1556 = vmatprep.subr.mxu0 0.0
      %1557 = vmatpush1.msra.mxu0 0.0
      %1558 = vmatprep.subr.mxu0 0.0
      %1559 = vmatpush1.msra.mxu0 0.0
      %1560 = vmatprep.subr.mxu0 0.0
      %1561 = vmatpush1.msra.mxu0 0.0
      %1562 = vmatprep.subr.mxu0 0.0
      %1563 = vmatpush1.msra.mxu0 0.0
      %1564 = vmatprep.subr.mxu0 0.0
      %1565 = vmatpush1.msra.mxu0 0.0
      %1566 = vmatprep.subr.mxu0 0.0
      %1567 = vmatpush1.msra.mxu0 0.0
      %1568 = vmatprep.subr.mxu0 0.0
      %1569 = vmatpush1.msra.mxu0 0.0
      %1570 = vmatprep.subr.mxu0 0.0
      %1571 = vmatpush1.msra.mxu0 0.0
      %1572 = vmatprep.subr.mxu0 0.0
      %1573 = vmatpush1.msra.mxu0 0.0
      %1574 = vmatprep.subr.mxu0 0.0
      %1575 = vmatpush1.msra.mxu0 0.0
      %1576 = vmatprep.subr.mxu0 0.0
      %1577 = vmatpush1.msra.mxu0 0.0
      %1578 = vmatprep.mubr.f32.mxu0 0.0
      %1579 = vmatmul.mubr.f32.gmra.mrb[0].mxu0 %v1323
      %v1580 = vpop.f32.mrb[0].mxu0
      %v1581 = vadd.f32 0.0, %v1580
      %v1582 = vpop.f32.mrb[0].mxu0
      %1583 = vmatprep.mubr.f32.mxu0 0.0
      %1584 = vmatmul.mubr.f32.gmra.mrb[0].mxu0 %v1326
      %v1585 = vpop.f32.mrb[0].mxu0
      %v1586 = vadd.f32 0.0, %v1585
      %v1587 = vpop.f32.mrb[0].mxu0
      %1588 = vmatprep.mubr.f32.mxu0 0.0
      %1589 = vmatmul.mubr.f32.gmra.mrb[0].mxu0 %v1329
      %v1590 = vpop.f32.mrb[0].mxu0
      %v1591 = vadd.f32 0.0, %v1590
      %v1592 = vpop.f32.mrb[0].mxu0
      %1593 = vmatprep.mubr.f32.mxu0 0.0
      %1594 = vmatmul.mubr.f32.gmra.mrb[0].mxu0 %v1332
      %v1595 = vpop.f32.mrb[0].mxu0
      %v1596 = vadd.f32 0.0, %v1595
      %v1597 = vpop.f32.mrb[0].mxu0
      %1598 = vmatprep.mubr.f32.mxu0 0.0
      %1599 = vmatmul.mubr.f32.gmra.mrb[0].mxu0 %v1335
      %v1600 = vpop.f32.mrb[0].mxu0
      %v1601 = vadd.f32 0.0, %v1600
      %v1602 = vpop.f32.mrb[0].mxu0
      %1603 = vmatprep.mubr.f32.mxu0 0.0
      %1604 = vmatmul.mubr.f32.gmra.mrb[0].mxu0 %v1338
      %v1605 = vpop.f32.mrb[0].mxu0
      %v1606 = vadd.f32 0.0, %v1605
      %v1607 = vpop.f32.mrb[0].mxu0
      %1608 = vmatprep.mubr.f32.mxu0 0.0
      %1609 = vmatmul.mubr.f32.gmra.mrb[0].mxu0 %v1341
      %v1610 = vpop.f32.mrb[0].mxu0
      %v1611 = vadd.f32 0.0, %v1610
      %v1612 = vpop.f32.mrb[0].mxu0
      %1613 = vmatprep.mubr.f32.mxu0 0.0
      %1614 = vmatmul.mubr.f32.gmra.mrb[0].mxu0 %v1344
      %v1615 = vpop.f32.mrb[0].mxu0
      %v1616 = vadd.f32 0.0, %v1615
      %v1617 = vpop.f32.mrb[0].mxu0
      %1618 = vmatprep.mubr.f32.mxu0 0.0
      %1619 = vmatmul.mubr.f32.gmra.mrb[0].mxu0 %v1347
      %v1620 = vpop.f32.mrb[0].mxu0
      %v1621 = vadd.f32 0.0, %v1620
      %v1622 = vpop.f32.mrb[0].mxu0
      %1623 = vmatprep.mubr.f32.mxu0 0.0
      %1624 = vmatmul.mubr.f32.gmra.mrb[0].mxu0 %v1350
      %v1625 = vpop.f32.mrb[0].mxu0
      %v1626 = vadd.f32 0.0, %v1625
      %v1627 = vpop.f32.mrb[0].mxu0
      %1628 = vmatprep.mubr.f32.mxu0 0.0
      %1629 = vmatmul.mubr.f32.gmra.mrb[0].mxu0 %v1353
      %v1630 = vpop.f32.mrb[0].mxu0
      %v1631 = vadd.f32 0.0, %v1630
      %v1632 = vpop.f32.mrb[0].mxu0
      %1633 = vmatprep.mubr.f32.mxu0 0.0
      %1634 = vmatmul.mubr.f32.gmra.mrb[0].mxu0 %v1356
      %v1635 = vpop.f32.mrb[0].mxu0
      %v1636 = vadd.f32 0.0, %v1635
      %v1637 = vpop.f32.mrb[0].mxu0
      %1638 = vmatprep.mubr.f32.mxu0 0.0
      %1639 = vmatmul.mubr.f32.gmra.mrb[0].mxu0 %v1359
      %v1640 = vpop.f32.mrb[0].mxu0
      %v1641 = vadd.f32 0.0, %v1640
      %v1642 = vpop.f32.mrb[0].mxu0
      %1643 = vmatprep.mubr.f32.mxu0 0.0
      %1644 = vmatmul.mubr.f32.gmra.mrb[0].mxu0 %v1362
      %v1645 = vpop.f32.mrb[0].mxu0
      %v1646 = vadd.f32 0.0, %v1645
      %v1647 = vpop.f32.mrb[0].mxu0
      %1648 = vmatprep.mubr.f32.mxu0 0.0
      %1649 = vmatmul.mubr.f32.gmra.mrb[0].mxu0 %v1365
      %v1650 = vpop.f32.mrb[0].mxu0
      %v1651 = vadd.f32 0.0, %v1650
      %v1652 = vpop.f32.mrb[0].mxu0
      %1653 = vmatprep.mubr.f32.mxu0 0.0
      %1654 = vmatmul.mubr.f32.gmra.mrb[0].mxu0 %v1368
      %v1655 = vpop.f32.mrb[0].mxu0
      %v1656 = vadd.f32 0.0, %v1655
      %v1657 = vpop.f32.mrb[0].mxu0
      %1658 = vmatprep.mubr.f32.mxu0 0.0
      %1659 = vmatmul.mubr.f32.gmra.mrb[0].mxu0 %v1371
      %v1660 = vpop.f32.mrb[0].mxu0
      %v1661 = vadd.f32 0.0, %v1660
      %v1662 = vpop.f32.mrb[0].mxu0
      %1663 = vmatprep.mubr.f32.mxu0 0.0
      %1664 = vmatmul.mubr.f32.gmra.mrb[0].mxu0 %v1374
      %v1665 = vpop.f32.mrb[0].mxu0
      %v1666 = vadd.f32 0.0, %v1665
      %v1667 = vpop.f32.mrb[0].mxu0
      %1668 = vmatprep.mubr.f32.mxu0 0.0
      %1669 = vmatmul.mubr.f32.gmra.mrb[0].mxu0 %v1377
      %v1670 = vpop.f32.mrb[0].mxu0
      %v1671 = vadd.f32 0.0, %v1670
      %v1672 = vpop.f32.mrb[0].mxu0
      %1673 = vmatprep.mubr.f32.mxu0 0.0
      %1674 = vmatmul.mubr.f32.gmra.mrb[0].mxu0 %v1380
      %v1675 = vpop.f32.mrb[0].mxu0
      %v1676 = vadd.f32 0.0, %v1675
      %v1677 = vpop.f32.mrb[0].mxu0
      %1678 = vmatprep.mubr.f32.mxu0 0.0
      %1679 = vmatmul.mubr.f32.gmra.mrb[0].mxu0 %v1383
      %v1680 = vpop.f32.mrb[0].mxu0
      %v1681 = vadd.f32 0.0, %v1680
      %v1682 = vpop.f32.mrb[0].mxu0
      %1683 = vmatprep.mubr.f32.mxu0 0.0
      %1684 = vmatmul.mubr.f32.gmra.mrb[0].mxu0 %v1386
      %v1685 = vpop.f32.mrb[0].mxu0
      %v1686 = vadd.f32 0.0, %v1685
      %v1687 = vpop.f32.mrb[0].mxu0
      %1688 = vmatprep.mubr.f32.mxu0 0.0
      %1689 = vmatmul.mubr.f32.gmra.mrb[0].mxu0 %v1389
      %v1690 = vpop.f32.mrb[0].mxu0
      %v1691 = vadd.f32 0.0, %v1690
      %v1692 = vpop.f32.mrb[0].mxu0
      %1693 = vmatprep.mubr.f32.mxu0 0.0
      %1694 = vmatmul.mubr.f32.gmra.mrb[0].mxu0 %v1392
      %v1695 = vpop.f32.mrb[0].mxu0
      %v1696 = vadd.f32 0.0, %v1695
      %v1697 = vpop.f32.mrb[0].mxu0
      %1698 = vmatprep.mubr.f32.mxu0 0.0
      %1699 = vmatmul.mubr.f32.gmra.mrb[0].mxu0 %v1395
      %v1700 = vpop.f32.mrb[0].mxu0
      %v1701 = vadd.f32 0.0, %v1700
      %v1702 = vpop.f32.mrb[0].mxu0
      %1703 = vmatprep.mubr.f32.mxu0 0.0
      %1704 = vmatmul.mubr.f32.gmra.mrb[0].mxu0 %v1398
      %v1705 = vpop.f32.mrb[0].mxu0
      %v1706 = vadd.f32 0.0, %v1705
      %v1707 = vpop.f32.mrb[0].mxu0
      %1708 = vmatprep.mubr.f32.mxu0 0.0
      %1709 = vmatmul.mubr.f32.gmra.mrb[0].mxu0 %v1401
      %v1710 = vpop.f32.mrb[0].mxu0
      %v1711 = vadd.f32 0.0, %v1710
      %v1712 = vpop.f32.mrb[0].mxu0
      %1713 = vmatprep.mubr.f32.mxu0 0.0
      %1714 = vmatmul.mubr.f32.gmra.mrb[0].mxu0 %v1404
      %v1715 = vpop.f32.mrb[0].mxu0
      %v1716 = vadd.f32 0.0, %v1715
      %v1717 = vpop.f32.mrb[0].mxu0
      %1718 = vmatprep.mubr.f32.mxu0 0.0
      %1719 = vmatmul.mubr.f32.gmra.mrb[0].mxu0 %v1407
      %v1720 = vpop.f32.mrb[0].mxu0
      %v1721 = vadd.f32 0.0, %v1720
      %v1722 = vpop.f32.mrb[0].mxu0
      %1723 = vmatprep.mubr.f32.mxu0 0.0
      %1724 = vmatmul.mubr.f32.gmra.mrb[0].mxu0 %v1410
      %v1725 = vpop.f32.mrb[0].mxu0
      %v1726 = vadd.f32 0.0, %v1725
      %v1727 = vpop.f32.mrb[0].mxu0
      %1728 = vmatprep.mubr.f32.mxu0 0.0
      %1729 = vmatmul.mubr.f32.gmra.mrb[0].mxu0 %v1413
      %v1730 = vpop.f32.mrb[0].mxu0
      %v1731 = vadd.f32 0.0, %v1730
      %v1732 = vpop.f32.mrb[0].mxu0
      %1733 = vmatprep.mubr.f32.mxu0 0.0
      %1734 = vmatmul.mubr.f32.gmra.mrb[0].mxu0 %v1416
      %v1735 = vpop.f32.mrb[0].mxu0
      %v1736 = vadd.f32 0.0, %v1735
      %v1737 = vpop.f32.mrb[0].mxu0
      %1738 = vmatprep.mubr.f32.mxu0 0.0
      %1739 = vmatmul.mubr.f32.gmra.mrb[0].mxu0 %v1419
      %v1740 = vpop.f32.mrb[0].mxu0
      %v1741 = vadd.f32 0.0, %v1740
      %v1742 = vpop.f32.mrb[0].mxu0
      %1743 = vmatprep.mubr.f32.mxu0 0.0
      %1744 = vmatmul.mubr.f32.gmra.mrb[0].mxu0 %v1422
      %v1745 = vpop.f32.mrb[0].mxu0
      %v1746 = vadd.f32 0.0, %v1745
      %v1747 = vpop.f32.mrb[0].mxu0
      %1748 = vmatprep.mubr.f32.mxu0 0.0
      %1749 = vmatmul.mubr.f32.gmra.mrb[0].mxu0 %v1425
      %v1750 = vpop.f32.mrb[0].mxu0
      %v1751 = vadd.f32 0.0, %v1750
      %v1752 = vpop.f32.mrb[0].mxu0
      %1753 = vmatprep.mubr.f32.mxu0 0.0
      %1754 = vmatmul.mubr.f32.gmra.mrb[0].mxu0 %v1428
      %v1755 = vpop.f32.mrb[0].mxu0
      %v1756 = vadd.f32 0.0, %v1755
      %v1757 = vpop.f32.mrb[0].mxu0
      %1758 = vmatprep.mubr.f32.mxu0 0.0
      %1759 = vmatmul.mubr.f32.gmra.mrb[0].mxu0 %v1431
      %v1760 = vpop.f32.mrb[0].mxu0
      %v1761 = vadd.f32 0.0, %v1760
      %v1762 = vpop.f32.mrb[0].mxu0
      %1763 = vmatprep.mubr.f32.mxu0 0.0
      %1764 = vmatmul.mubr.f32.gmra.mrb[0].mxu0 %v1434
      %v1765 = vpop.f32.mrb[0].mxu0
      %v1766 = vadd.f32 0.0, %v1765
      %v1767 = vpop.f32.mrb[0].mxu0
      %1768 = vmatprep.mubr.f32.mxu0 0.0
      %1769 = vmatmul.mubr.f32.gmra.mrb[0].mxu0 %v1437
      %v1770 = vpop.f32.mrb[0].mxu0
      %v1771 = vadd.f32 0.0, %v1770
      %v1772 = vpop.f32.mrb[0].mxu0
      %1773 = vmatprep.mubr.f32.mxu0 0.0
      %1774 = vmatmul.mubr.f32.gmra.mrb[0].mxu0 %v1440
      %v1775 = vpop.f32.mrb[0].mxu0
      %v1776 = vadd.f32 0.0, %v1775
      %v1777 = vpop.f32.mrb[0].mxu0
      %1778 = vmatprep.mubr.f32.mxu0 0.0
      %1779 = vmatmul.mubr.f32.gmra.mrb[0].mxu0 %v1443
      %v1780 = vpop.f32.mrb[0].mxu0
      %v1781 = vadd.f32 0.0, %v1780
      %v1782 = vpop.f32.mrb[0].mxu0
      %1783 = vmatprep.mubr.f32.mxu0 0.0
      %1784 = vmatmul.mubr.f32.gmra.mrb[0].mxu0 %v1446
      %v1785 = vpop.f32.mrb[0].mxu0
      %v1786 = vadd.f32 0.0, %v1785
      %v1787 = vpop.f32.mrb[0].mxu0
      %1788 = vmatprep.mubr.f32.mxu0 0.0
      %1789 = vmatmul.mubr.f32.gmra.mrb[0].mxu0 %v1449
      %v1790 = vpop.f32.mrb[0].mxu0
      %v1791 = vadd.f32 0.0, %v1790
      %v1792 = vpop.f32.mrb[0].mxu0
      %1793 = vmatprep.mubr.f32.mxu0 0.0
      %1794 = vmatmul.mubr.f32.gmra.mrb[0].mxu0 %v1452
      %v1795 = vpop.f32.mrb[0].mxu0
      %v1796 = vadd.f32 0.0, %v1795
      %v1797 = vpop.f32.mrb[0].mxu0
      %1798 = vmatprep.mubr.f32.mxu0 0.0
      %1799 = vmatmul.mubr.f32.gmra.mrb[0].mxu0 %v1455
      %v1800 = vpop.f32.mrb[0].mxu0
      %v1801 = vadd.f32 0.0, %v1800
      %v1802 = vpop.f32.mrb[0].mxu0
      %1803 = vmatprep.mubr.f32.mxu0 0.0
      %1804 = vmatmul.mubr.f32.gmra.mrb[0].mxu0 %v1458
      %v1805 = vpop.f32.mrb[0].mxu0
      %v1806 = vadd.f32 0.0, %v1805
      %v1807 = vpop.f32.mrb[0].mxu0
      %1808 = vmatprep.mubr.f32.mxu0 0.0
      %1809 = vmatmul.mubr.f32.gmra.mrb[0].mxu0 %v1461
      %v1810 = vpop.f32.mrb[0].mxu0
      %v1811 = vadd.f32 0.0, %v1810
      %v1812 = vpop.f32.mrb[0].mxu0
      %1813 = vmatprep.mubr.f32.mxu0 0.0
      %1814 = vmatmul.mubr.f32.gmra.mrb[0].mxu0 %v1464
      %v1815 = vpop.f32.mrb[0].mxu0
      %v1816 = vadd.f32 0.0, %v1815
      %v1817 = vpop.f32.mrb[0].mxu0
      %1818 = vmatprep.mubr.f32.mxu0 0.0
      %1819 = vmatmul.mubr.f32.gmra.mrb[0].mxu0 %v1467
      %v1820 = vpop.f32.mrb[0].mxu0
      %v1821 = vadd.f32 0.0, %v1820
      %v1822 = vpop.f32.mrb[0].mxu0
      %1823 = vmatprep.mubr.f32.mxu0 0.0
      %1824 = vmatmul.mubr.f32.gmra.mrb[0].mxu0 %v1470
      %v1825 = vpop.f32.mrb[0].mxu0
      %v1826 = vadd.f32 0.0, %v1825
      %v1827 = vpop.f32.mrb[0].mxu0
      %1828 = vmatprep.mubr.f32.mxu0 0.0
      %1829 = vmatmul.mubr.f32.gmra.mrb[0].mxu0 %v1473
      %v1830 = vpop.f32.mrb[0].mxu0
      %v1831 = vadd.f32 0.0, %v1830
      %v1832 = vpop.f32.mrb[0].mxu0
      %1833 = vmatprep.mubr.f32.mxu0 0.0
      %1834 = vmatmul.mubr.f32.gmra.mrb[0].mxu0 %v1476
      %v1835 = vpop.f32.mrb[0].mxu0
      %v1836 = vadd.f32 0.0, %v1835
      %v1837 = vpop.f32.mrb[0].mxu0
      %1838 = vmatprep.mubr.f32.mxu0 0.0
      %1839 = vmatmul.mubr.f32.gmra.mrb[0].mxu0 %v1479
      %v1840 = vpop.f32.mrb[0].mxu0
      %v1841 = vadd.f32 0.0, %v1840
      %v1842 = vpop.f32.mrb[0].mxu0
      %1843 = vmatprep.mubr.f32.mxu0 0.0
      %1844 = vmatmul.mubr.f32.gmra.mrb[0].mxu0 %v1482
      %v1845 = vpop.f32.mrb[0].mxu0
      %v1846 = vadd.f32 0.0, %v1845
      %v1847 = vpop.f32.mrb[0].mxu0
      %1848 = vmatprep.mubr.f32.mxu0 0.0
      %1849 = vmatmul.mubr.f32.gmra.mrb[0].mxu0 %v1485
      %v1850 = vpop.f32.mrb[0].mxu0
      %v1851 = vadd.f32 0.0, %v1850
      %v1852 = vpop.f32.mrb[0].mxu0
      %1853 = vmatprep.mubr.f32.mxu0 0.0
      %1854 = vmatmul.mubr.f32.gmra.mrb[0].mxu0 %v1488
      %v1855 = vpop.f32.mrb[0].mxu0
      %v1856 = vadd.f32 0.0, %v1855
      %v1857 = vpop.f32.mrb[0].mxu0
      %1858 = vmatprep.mubr.f32.mxu0 0.0
      %1859 = vmatmul.mubr.f32.gmra.mrb[0].mxu0 %v1491
      %v1860 = vpop.f32.mrb[0].mxu0
      %v1861 = vadd.f32 0.0, %v1860
      %v1862 = vpop.f32.mrb[0].mxu0
      %1863 = vmatprep.mubr.f32.mxu0 0.0
      %1864 = vmatmul.mubr.f32.gmra.mrb[0].mxu0 %v1494
      %v1865 = vpop.f32.mrb[0].mxu0
      %v1866 = vadd.f32 0.0, %v1865
      %v1867 = vpop.f32.mrb[0].mxu0
      %1868 = vmatprep.mubr.f32.mxu0 0.0
      %1869 = vmatmul.mubr.f32.gmra.mrb[0].mxu0 %v1497
      %v1870 = vpop.f32.mrb[0].mxu0
      %v1871 = vadd.f32 0.0, %v1870
      %v1872 = vpop.f32.mrb[0].mxu0
      %1873 = vmatprep.mubr.f32.mxu0 0.0
      %1874 = vmatmul.mubr.f32.gmra.mrb[0].mxu0 %v1500
      %v1875 = vpop.f32.mrb[0].mxu0
      %v1876 = vadd.f32 0.0, %v1875
      %v1877 = vpop.f32.mrb[0].mxu0
      %1878 = vmatprep.mubr.f32.mxu0 0.0
      %1879 = vmatmul.mubr.f32.gmra.mrb[0].mxu0 %v1503
      %v1880 = vpop.f32.mrb[0].mxu0
      %v1881 = vadd.f32 0.0, %v1880
      %v1882 = vpop.f32.mrb[0].mxu0
      %1883 = vmatprep.mubr.f32.mxu0 0.0
      %1884 = vmatmul.mubr.f32.gmra.mrb[0].mxu0 %v1506
      %v1885 = vpop.f32.mrb[0].mxu0
      %v1886 = vadd.f32 0.0, %v1885
      %v1887 = vpop.f32.mrb[0].mxu0
      %1888 = vmatprep.mubr.f32.mxu0 0.0
      %1889 = vmatmul.mubr.f32.gmra.mrb[0].mxu0 %v1509
      %v1890 = vpop.f32.mrb[0].mxu0
      %v1891 = vadd.f32 0.0, %v1890
      %v1892 = vpop.f32.mrb[0].mxu0
      %1893 = vmatprep.mubr.f32.mxu0 0.0
      %1894 = vmatmul.mubr.f32.gmra.mrb[0].mxu0 %v1512
      %v1895 = vpop.f32.mrb[0].mxu0
      %v1896 = vadd.f32 0.0, %v1895
      %v1897 = vpop.f32.mrb[0].mxu0
      %1898 = vdwg.mxu0
      %v1899 = vmul.f32 %v1002, %v1581
      %v1900 = vmul.f32 %v1007, %v1586
      %v1901 = vmul.f32 %v1012, %v1591
      %v1902 = vmul.f32 %v1017, %v1596
      %v1903 = vmul.f32 %v1022, %v1601
      %v1904 = vmul.f32 %v1027, %v1606
      %v1905 = vmul.f32 %v1032, %v1611
      %v1906 = vmul.f32 %v1037, %v1616
      %v1907 = vmul.f32 %v1042, %v1621
      %v1908 = vmul.f32 %v1047, %v1626
      %v1909 = vmul.f32 %v1052, %v1631
      %v1910 = vmul.f32 %v1057, %v1636
      %v1911 = vmul.f32 %v1062, %v1641
      %v1912 = vmul.f32 %v1067, %v1646
      %v1913 = vmul.f32 %v1072, %v1651
      %v1914 = vmul.f32 %v1077, %v1656
      %v1915 = vmul.f32 %v1082, %v1661
      %v1916 = vmul.f32 %v1087, %v1666
      %v1917 = vmul.f32 %v1092, %v1671
      %v1918 = vmul.f32 %v1097, %v1676
      %v1919 = vmul.f32 %v1102, %v1681
      %v1920 = vmul.f32 %v1107, %v1686
      %v1921 = vmul.f32 %v1112, %v1691
      %v1922 = vmul.f32 %v1117, %v1696
      %v1923 = vmul.f32 %v1122, %v1701
      %v1924 = vmul.f32 %v1127, %v1706
      %v1925 = vmul.f32 %v1132, %v1711
      %v1926 = vmul.f32 %v1137, %v1716
      %v1927 = vmul.f32 %v1142, %v1721
      %v1928 = vmul.f32 %v1147, %v1726
      %v1929 = vmul.f32 %v1152, %v1731
      %v1930 = vmul.f32 %v1157, %v1736
      %v1931 = vmul.f32 %v1162, %v1741
      %v1932 = vmul.f32 %v1167, %v1746
      %v1933 = vmul.f32 %v1172, %v1751
      %v1934 = vmul.f32 %v1177, %v1756
      %v1935 = vmul.f32 %v1182, %v1761
      %v1936 = vmul.f32 %v1187, %v1766
      %v1937 = vmul.f32 %v1192, %v1771
      %v1938 = vmul.f32 %v1197, %v1776
      %v1939 = vmul.f32 %v1202, %v1781
      %v1940 = vmul.f32 %v1207, %v1786
      %v1941 = vmul.f32 %v1212, %v1791
      %v1942 = vmul.f32 %v1217, %v1796
      %v1943 = vmul.f32 %v1222, %v1801
      %v1944 = vmul.f32 %v1227, %v1806
      %v1945 = vmul.f32 %v1232, %v1811
      %v1946 = vmul.f32 %v1237, %v1816
      %v1947 = vmul.f32 %v1242, %v1821
      %v1948 = vmul.f32 %v1247, %v1826
      %v1949 = vmul.f32 %v1252, %v1831
      %v1950 = vmul.f32 %v1257, %v1836
      %v1951 = vmul.f32 %v1262, %v1841
      %v1952 = vmul.f32 %v1267, %v1846
      %v1953 = vmul.f32 %v1272, %v1851
      %v1954 = vmul.f32 %v1277, %v1856
      %v1955 = vmul.f32 %v1282, %v1861
      %v1956 = vmul.f32 %v1287, %v1866
      %v1957 = vmul.f32 %v1292, %v1871
      %v1958 = vmul.f32 %v1297, %v1876
      %v1959 = vmul.f32 %v1302, %v1881
      %v1960 = vmul.f32 %v1307, %v1886
      %v1961 = vmul.f32 %v1312, %v1891
      %v1962 = vmul.f32 %v1317, %v1896
      %v1963 = vld [vmem:[%s3] sm:$0xff]
      %v1964 = vld [vmem:[%s3 + $0x8] sm:$0xff]
      %v1965 = vld [vmem:[%s3 + $0x10] sm:$0xff]
      %v1966 = vld [vmem:[%s3 + $0x18] sm:$0xff]
      %v1967 = vld [vmem:[%s3 + $0x20] sm:$0xff]
      %v1968 = vld [vmem:[%s3 + $0x28] sm:$0xff]
      %v1969 = vld [vmem:[%s3 + $0x30] sm:$0xff]
      %v1970 = vld [vmem:[%s3 + $0x38] sm:$0xff]
      %v1971 = vld [vmem:[%s4] sm:$0xff]
      %v1972 = vld [vmem:[%s4 + $0x8] sm:$0xff]
      %1973 = vmatprep.subr.mxu0 0.0
      %1974 = vmatpush1.msra.mxu0 %v1971
      %1975 = vmatprep.subr.mxu0 0.0
      %1976 = vmatpush1.msra.mxu0 %v1972
      %1977 = vmatprep.subr.mxu0 0.0
      %1978 = vmatpush1.msra.mxu0 0.0
      %1979 = vmatprep.subr.mxu0 0.0
      %1980 = vmatpush1.msra.mxu0 0.0
      %1981 = vmatprep.subr.mxu0 0.0
      %1982 = vmatpush1.msra.mxu0 0.0
      %1983 = vmatprep.subr.mxu0 0.0
      %1984 = vmatpush1.msra.mxu0 0.0
      %1985 = vmatprep.subr.mxu0 0.0
      %1986 = vmatpush1.msra.mxu0 0.0
      %1987 = vmatprep.subr.mxu0 0.0
      %1988 = vmatpush1.msra.mxu0 0.0
      %1989 = vmatprep.subr.mxu0 0.0
      %1990 = vmatpush1.msra.mxu0 0.0
      %1991 = vmatprep.subr.mxu0 0.0
      %1992 = vmatpush1.msra.mxu0 0.0
      %1993 = vmatprep.subr.mxu0 0.0
      %1994 = vmatpush1.msra.mxu0 0.0
      %1995 = vmatprep.subr.mxu0 0.0
      %1996 = vmatpush1.msra.mxu0 0.0
      %1997 = vmatprep.subr.mxu0 0.0
      %1998 = vmatpush1.msra.mxu0 0.0
      %1999 = vmatprep.subr.mxu0 0.0
      %2000 = vmatpush1.msra.mxu0 0.0
      %2001 = vmatprep.subr.mxu0 0.0
      %2002 = vmatpush1.msra.mxu0 0.0
      %2003 = vmatprep.subr.mxu0 0.0
      %2004 = vmatpush1.msra.mxu0 0.0
      %2005 = vmatprep.subr.mxu0 0.0
      %2006 = vmatpush1.msra.mxu0 0.0
      %2007 = vmatprep.subr.mxu0 0.0
      %2008 = vmatpush1.msra.mxu0 0.0
      %2009 = vmatprep.subr.mxu0 0.0
      %2010 = vmatpush1.msra.mxu0 0.0
      %2011 = vmatprep.subr.mxu0 0.0
      %2012 = vmatpush1.msra.mxu0 0.0
      %2013 = vmatprep.subr.mxu0 0.0
      %2014 = vmatpush1.msra.mxu0 0.0
      %2015 = vmatprep.subr.mxu0 0.0
      %2016 = vmatpush1.msra.mxu0 0.0
      %2017 = vmatprep.subr.mxu0 0.0
      %2018 = vmatpush1.msra.mxu0 0.0
      %2019 = vmatprep.subr.mxu0 0.0
      %2020 = vmatpush1.msra.mxu0 0.0
      %2021 = vmatprep.subr.mxu0 0.0
      %2022 = vmatpush1.msra.mxu0 0.0
      %2023 = vmatprep.subr.mxu0 0.0
      %2024 = vmatpush1.msra.mxu0 0.0
      %2025 = vmatprep.subr.mxu0 0.0
      %2026 = vmatpush1.msra.mxu0 0.0
      %2027 = vmatprep.subr.mxu0 0.0
      %2028 = vmatpush1.msra.mxu0 0.0
      %2029 = vmatprep.subr.mxu0 0.0
      %2030 = vmatpush1.msra.mxu0 0.0
      %2031 = vmatprep.subr.mxu0 0.0
      %2032 = vmatpush1.msra.mxu0 0.0
      %2033 = vmatprep.subr.mxu0 0.0
      %2034 = vmatpush1.msra.mxu0 0.0
      %2035 = vmatprep.subr.mxu0 0.0
      %2036 = vmatpush1.msra.mxu0 0.0
      %2037 = vmatprep.mubr.f32.mxu0 0.0
      %2038 = vmatmul.mubr.f32.gmra.mrb[0].mxu0 %v1323
      %v2039 = vpop.f32.mrb[0].mxu0
      %v2040 = vadd.f32 0.0, %v2039
      %v2041 = vpop.f32.mrb[0].mxu0
      %2042 = vmatprep.mubr.f32.mxu0 0.0
      %2043 = vmatmul.mubr.f32.gmra.mrb[0].mxu0 %v1326
      %v2044 = vpop.f32.mrb[0].mxu0
      %v2045 = vadd.f32 0.0, %v2044
      %v2046 = vpop.f32.mrb[0].mxu0
      %2047 = vmatprep.mubr.f32.mxu0 0.0
      %2048 = vmatmul.mubr.f32.gmra.mrb[0].mxu0 %v1329
      %v2049 = vpop.f32.mrb[0].mxu0
      %v2050 = vadd.f32 0.0, %v2049
      %v2051 = vpop.f32.mrb[0].mxu0
      %2052 = vmatprep.mubr.f32.mxu0 0.0
      %2053 = vmatmul.mubr.f32.gmra.mrb[0].mxu0 %v1332
      %v2054 = vpop.f32.mrb[0].mxu0
      %v2055 = vadd.f32 0.0, %v2054
      %v2056 = vpop.f32.mrb[0].mxu0
      %2057 = vmatprep.mubr.f32.mxu0 0.0
      %2058 = vmatmul.mubr.f32.gmra.mrb[0].mxu0 %v1335
      %v2059 = vpop.f32.mrb[0].mxu0
      %v2060 = vadd.f32 0.0, %v2059
      %v2061 = vpop.f32.mrb[0].mxu0
      %2062 = vmatprep.mubr.f32.mxu0 0.0
      %2063 = vmatmul.mubr.f32.gmra.mrb[0].mxu0 %v1338
      %v2064 = vpop.f32.mrb[0].mxu0
      %v2065 = vadd.f32 0.0, %v2064
      %v2066 = vpop.f32.mrb[0].mxu0
      %2067 = vmatprep.mubr.f32.mxu0 0.0
      %2068 = vmatmul.mubr.f32.gmra.mrb[0].mxu0 %v1341
      %v2069 = vpop.f32.mrb[0].mxu0
      %v2070 = vadd.f32 0.0, %v2069
      %v2071 = vpop.f32.mrb[0].mxu0
      %2072 = vmatprep.mubr.f32.mxu0 0.0
      %2073 = vmatmul.mubr.f32.gmra.mrb[0].mxu0 %v1344
      %v2074 = vpop.f32.mrb[0].mxu0
      %v2075 = vadd.f32 0.0, %v2074
      %v2076 = vpop.f32.mrb[0].mxu0
      %2077 = vmatprep.mubr.f32.mxu0 0.0
      %2078 = vmatmul.mubr.f32.gmra.mrb[0].mxu0 %v1347
      %v2079 = vpop.f32.mrb[0].mxu0
      %v2080 = vadd.f32 0.0, %v2079
      %v2081 = vpop.f32.mrb[0].mxu0
      %2082 = vmatprep.mubr.f32.mxu0 0.0
      %2083 = vmatmul.mubr.f32.gmra.mrb[0].mxu0 %v1350
      %v2084 = vpop.f32.mrb[0].mxu0
      %v2085 = vadd.f32 0.0, %v2084
      %v2086 = vpop.f32.mrb[0].mxu0
      %2087 = vmatprep.mubr.f32.mxu0 0.0
      %2088 = vmatmul.mubr.f32.gmra.mrb[0].mxu0 %v1353
      %v2089 = vpop.f32.mrb[0].mxu0
      %v2090 = vadd.f32 0.0, %v2089
      %v2091 = vpop.f32.mrb[0].mxu0
      %2092 = vmatprep.mubr.f32.mxu0 0.0
      %2093 = vmatmul.mubr.f32.gmra.mrb[0].mxu0 %v1356
      %v2094 = vpop.f32.mrb[0].mxu0
      %v2095 = vadd.f32 0.0, %v2094
      %v2096 = vpop.f32.mrb[0].mxu0
      %2097 = vmatprep.mubr.f32.mxu0 0.0
      %2098 = vmatmul.mubr.f32.gmra.mrb[0].mxu0 %v1359
      %v2099 = vpop.f32.mrb[0].mxu0
      %v2100 = vadd.f32 0.0, %v2099
      %v2101 = vpop.f32.mrb[0].mxu0
      %2102 = vmatprep.mubr.f32.mxu0 0.0
      %2103 = vmatmul.mubr.f32.gmra.mrb[0].mxu0 %v1362
      %v2104 = vpop.f32.mrb[0].mxu0
      %v2105 = vadd.f32 0.0, %v2104
      %v2106 = vpop.f32.mrb[0].mxu0
      %2107 = vmatprep.mubr.f32.mxu0 0.0
      %2108 = vmatmul.mubr.f32.gmra.mrb[0].mxu0 %v1365
      %v2109 = vpop.f32.mrb[0].mxu0
      %v2110 = vadd.f32 0.0, %v2109
      %v2111 = vpop.f32.mrb[0].mxu0
      %2112 = vmatprep.mubr.f32.mxu0 0.0
      %2113 = vmatmul.mubr.f32.gmra.mrb[0].mxu0 %v1368
      %v2114 = vpop.f32.mrb[0].mxu0
      %v2115 = vadd.f32 0.0, %v2114
      %v2116 = vpop.f32.mrb[0].mxu0
      %2117 = vmatprep.mubr.f32.mxu0 0.0
      %2118 = vmatmul.mubr.f32.gmra.mrb[0].mxu0 %v1371
      %v2119 = vpop.f32.mrb[0].mxu0
      %v2120 = vadd.f32 0.0, %v2119
      %v2121 = vpop.f32.mrb[0].mxu0
      %2122 = vmatprep.mubr.f32.mxu0 0.0
      %2123 = vmatmul.mubr.f32.gmra.mrb[0].mxu0 %v1374
      %v2124 = vpop.f32.mrb[0].mxu0
      %v2125 = vadd.f32 0.0, %v2124
      %v2126 = vpop.f32.mrb[0].mxu0
      %2127 = vmatprep.mubr.f32.mxu0 0.0
      %2128 = vmatmul.mubr.f32.gmra.mrb[0].mxu0 %v1377
      %v2129 = vpop.f32.mrb[0].mxu0
      %v2130 = vadd.f32 0.0, %v2129
      %v2131 = vpop.f32.mrb[0].mxu0
      %2132 = vmatprep.mubr.f32.mxu0 0.0
      %2133 = vmatmul.mubr.f32.gmra.mrb[0].mxu0 %v1380
      %v2134 = vpop.f32.mrb[0].mxu0
      %v2135 = vadd.f32 0.0, %v2134
      %v2136 = vpop.f32.mrb[0].mxu0
      %2137 = vmatprep.mubr.f32.mxu0 0.0
      %2138 = vmatmul.mubr.f32.gmra.mrb[0].mxu0 %v1383
      %v2139 = vpop.f32.mrb[0].mxu0
      %v2140 = vadd.f32 0.0, %v2139
      %v2141 = vpop.f32.mrb[0].mxu0
      %2142 = vmatprep.mubr.f32.mxu0 0.0
      %2143 = vmatmul.mubr.f32.gmra.mrb[0].mxu0 %v1386
      %v2144 = vpop.f32.mrb[0].mxu0
      %v2145 = vadd.f32 0.0, %v2144
      %v2146 = vpop.f32.mrb[0].mxu0
      %2147 = vmatprep.mubr.f32.mxu0 0.0
      %2148 = vmatmul.mubr.f32.gmra.mrb[0].mxu0 %v1389
      %v2149 = vpop.f32.mrb[0].mxu0
      %v2150 = vadd.f32 0.0, %v2149
      %v2151 = vpop.f32.mrb[0].mxu0
      %2152 = vmatprep.mubr.f32.mxu0 0.0
      %2153 = vmatmul.mubr.f32.gmra.mrb[0].mxu0 %v1392
      %v2154 = vpop.f32.mrb[0].mxu0
      %v2155 = vadd.f32 0.0, %v2154
      %v2156 = vpop.f32.mrb[0].mxu0
      %2157 = vmatprep.mubr.f32.mxu0 0.0
      %2158 = vmatmul.mubr.f32.gmra.mrb[0].mxu0 %v1395
      %v2159 = vpop.f32.mrb[0].mxu0
      %v2160 = vadd.f32 0.0, %v2159
      %v2161 = vpop.f32.mrb[0].mxu0
      %2162 = vmatprep.mubr.f32.mxu0 0.0
      %2163 = vmatmul.mubr.f32.gmra.mrb[0].mxu0 %v1398
      %v2164 = vpop.f32.mrb[0].mxu0
      %v2165 = vadd.f32 0.0, %v2164
      %v2166 = vpop.f32.mrb[0].mxu0
      %2167 = vmatprep.mubr.f32.mxu0 0.0
      %2168 = vmatmul.mubr.f32.gmra.mrb[0].mxu0 %v1401
      %v2169 = vpop.f32.mrb[0].mxu0
      %v2170 = vadd.f32 0.0, %v2169
      %v2171 = vpop.f32.mrb[0].mxu0
      %2172 = vmatprep.mubr.f32.mxu0 0.0
      %2173 = vmatmul.mubr.f32.gmra.mrb[0].mxu0 %v1404
      %v2174 = vpop.f32.mrb[0].mxu0
      %v2175 = vadd.f32 0.0, %v2174
      %v2176 = vpop.f32.mrb[0].mxu0
      %2177 = vmatprep.mubr.f32.mxu0 0.0
      %2178 = vmatmul.mubr.f32.gmra.mrb[0].mxu0 %v1407
      %v2179 = vpop.f32.mrb[0].mxu0
      %v2180 = vadd.f32 0.0, %v2179
      %v2181 = vpop.f32.mrb[0].mxu0
      %2182 = vmatprep.mubr.f32.mxu0 0.0
      %2183 = vmatmul.mubr.f32.gmra.mrb[0].mxu0 %v1410
      %v2184 = vpop.f32.mrb[0].mxu0
      %v2185 = vadd.f32 0.0, %v2184
      %v2186 = vpop.f32.mrb[0].mxu0
      %2187 = vmatprep.mubr.f32.mxu0 0.0
      %2188 = vmatmul.mubr.f32.gmra.mrb[0].mxu0 %v1413
      %v2189 = vpop.f32.mrb[0].mxu0
      %v2190 = vadd.f32 0.0, %v2189
      %v2191 = vpop.f32.mrb[0].mxu0
      %2192 = vmatprep.mubr.f32.mxu0 0.0
      %2193 = vmatmul.mubr.f32.gmra.mrb[0].mxu0 %v1416
      %v2194 = vpop.f32.mrb[0].mxu0
      %v2195 = vadd.f32 0.0, %v2194
      %v2196 = vpop.f32.mrb[0].mxu0
      %2197 = vmatprep.mubr.f32.mxu0 0.0
      %2198 = vmatmul.mubr.f32.gmra.mrb[0].mxu0 %v1419
      %v2199 = vpop.f32.mrb[0].mxu0
      %v2200 = vadd.f32 0.0, %v2199
      %v2201 = vpop.f32.mrb[0].mxu0
      %2202 = vmatprep.mubr.f32.mxu0 0.0
      %2203 = vmatmul.mubr.f32.gmra.mrb[0].mxu0 %v1422
      %v2204 = vpop.f32.mrb[0].mxu0
      %v2205 = vadd.f32 0.0, %v2204
      %v2206 = vpop.f32.mrb[0].mxu0
      %2207 = vmatprep.mubr.f32.mxu0 0.0
      %2208 = vmatmul.mubr.f32.gmra.mrb[0].mxu0 %v1425
      %v2209 = vpop.f32.mrb[0].mxu0
      %v2210 = vadd.f32 0.0, %v2209
      %v2211 = vpop.f32.mrb[0].mxu0
      %2212 = vmatprep.mubr.f32.mxu0 0.0
      %2213 = vmatmul.mubr.f32.gmra.mrb[0].mxu0 %v1428
      %v2214 = vpop.f32.mrb[0].mxu0
      %v2215 = vadd.f32 0.0, %v2214
      %v2216 = vpop.f32.mrb[0].mxu0
      %2217 = vmatprep.mubr.f32.mxu0 0.0
      %2218 = vmatmul.mubr.f32.gmra.mrb[0].mxu0 %v1431
      %v2219 = vpop.f32.mrb[0].mxu0
      %v2220 = vadd.f32 0.0, %v2219
      %v2221 = vpop.f32.mrb[0].mxu0
      %2222 = vmatprep.mubr.f32.mxu0 0.0
      %2223 = vmatmul.mubr.f32.gmra.mrb[0].mxu0 %v1434
      %v2224 = vpop.f32.mrb[0].mxu0
      %v2225 = vadd.f32 0.0, %v2224
      %v2226 = vpop.f32.mrb[0].mxu0
      %2227 = vmatprep.mubr.f32.mxu0 0.0
      %2228 = vmatmul.mubr.f32.gmra.mrb[0].mxu0 %v1437
      %v2229 = vpop.f32.mrb[0].mxu0
      %v2230 = vadd.f32 0.0, %v2229
      %v2231 = vpop.f32.mrb[0].mxu0
      %2232 = vmatprep.mubr.f32.mxu0 0.0
      %2233 = vmatmul.mubr.f32.gmra.mrb[0].mxu0 %v1440
      %v2234 = vpop.f32.mrb[0].mxu0
      %v2235 = vadd.f32 0.0, %v2234
      %v2236 = vpop.f32.mrb[0].mxu0
      %2237 = vmatprep.mubr.f32.mxu0 0.0
      %2238 = vmatmul.mubr.f32.gmra.mrb[0].mxu0 %v1443
      %v2239 = vpop.f32.mrb[0].mxu0
      %v2240 = vadd.f32 0.0, %v2239
      %v2241 = vpop.f32.mrb[0].mxu0
      %2242 = vmatprep.mubr.f32.mxu0 0.0
      %2243 = vmatmul.mubr.f32.gmra.mrb[0].mxu0 %v1446
      %v2244 = vpop.f32.mrb[0].mxu0
      %v2245 = vadd.f32 0.0, %v2244
      %v2246 = vpop.f32.mrb[0].mxu0
      %2247 = vmatprep.mubr.f32.mxu0 0.0
      %2248 = vmatmul.mubr.f32.gmra.mrb[0].mxu0 %v1449
      %v2249 = vpop.f32.mrb[0].mxu0
      %v2250 = vadd.f32 0.0, %v2249
      %v2251 = vpop.f32.mrb[0].mxu0
      %2252 = vmatprep.mubr.f32.mxu0 0.0
      %2253 = vmatmul.mubr.f32.gmra.mrb[0].mxu0 %v1452
      %v2254 = vpop.f32.mrb[0].mxu0
      %v2255 = vadd.f32 0.0, %v2254
      %v2256 = vpop.f32.mrb[0].mxu0
      %2257 = vmatprep.mubr.f32.mxu0 0.0
      %2258 = vmatmul.mubr.f32.gmra.mrb[0].mxu0 %v1455
      %v2259 = vpop.f32.mrb[0].mxu0
      %v2260 = vadd.f32 0.0, %v2259
      %v2261 = vpop.f32.mrb[0].mxu0
      %2262 = vmatprep.mubr.f32.mxu0 0.0
      %2263 = vmatmul.mubr.f32.gmra.mrb[0].mxu0 %v1458
      %v2264 = vpop.f32.mrb[0].mxu0
      %v2265 = vadd.f32 0.0, %v2264
      %v2266 = vpop.f32.mrb[0].mxu0
      %2267 = vmatprep.mubr.f32.mxu0 0.0
      %2268 = vmatmul.mubr.f32.gmra.mrb[0].mxu0 %v1461
      %v2269 = vpop.f32.mrb[0].mxu0
      %v2270 = vadd.f32 0.0, %v2269
      %v2271 = vpop.f32.mrb[0].mxu0
      %2272 = vmatprep.mubr.f32.mxu0 0.0
      %2273 = vmatmul.mubr.f32.gmra.mrb[0].mxu0 %v1464
      %v2274 = vpop.f32.mrb[0].mxu0
      %v2275 = vadd.f32 0.0, %v2274
      %v2276 = vpop.f32.mrb[0].mxu0
      %2277 = vmatprep.mubr.f32.mxu0 0.0
      %2278 = vmatmul.mubr.f32.gmra.mrb[0].mxu0 %v1467
      %v2279 = vpop.f32.mrb[0].mxu0
      %v2280 = vadd.f32 0.0, %v2279
      %v2281 = vpop.f32.mrb[0].mxu0
      %2282 = vmatprep.mubr.f32.mxu0 0.0
      %2283 = vmatmul.mubr.f32.gmra.mrb[0].mxu0 %v1470
      %v2284 = vpop.f32.mrb[0].mxu0
      %v2285 = vadd.f32 0.0, %v2284
      %v2286 = vpop.f32.mrb[0].mxu0
      %2287 = vmatprep.mubr.f32.mxu0 0.0
      %2288 = vmatmul.mubr.f32.gmra.mrb[0].mxu0 %v1473
      %v2289 = vpop.f32.mrb[0].mxu0
      %v2290 = vadd.f32 0.0, %v2289
      %v2291 = vpop.f32.mrb[0].mxu0
      %2292 = vmatprep.mubr.f32.mxu0 0.0
      %2293 = vmatmul.mubr.f32.gmra.mrb[0].mxu0 %v1476
      %v2294 = vpop.f32.mrb[0].mxu0
      %v2295 = vadd.f32 0.0, %v2294
      %v2296 = vpop.f32.mrb[0].mxu0
      %2297 = vmatprep.mubr.f32.mxu0 0.0
      %2298 = vmatmul.mubr.f32.gmra.mrb[0].mxu0 %v1479
      %v2299 = vpop.f32.mrb[0].mxu0
      %v2300 = vadd.f32 0.0, %v2299
      %v2301 = vpop.f32.mrb[0].mxu0
      %2302 = vmatprep.mubr.f32.mxu0 0.0
      %2303 = vmatmul.mubr.f32.gmra.mrb[0].mxu0 %v1482
      %v2304 = vpop.f32.mrb[0].mxu0
      %v2305 = vadd.f32 0.0, %v2304
      %v2306 = vpop.f32.mrb[0].mxu0
      %2307 = vmatprep.mubr.f32.mxu0 0.0
      %2308 = vmatmul.mubr.f32.gmra.mrb[0].mxu0 %v1485
      %v2309 = vpop.f32.mrb[0].mxu0
      %v2310 = vadd.f32 0.0, %v2309
      %v2311 = vpop.f32.mrb[0].mxu0
      %2312 = vmatprep.mubr.f32.mxu0 0.0
      %2313 = vmatmul.mubr.f32.gmra.mrb[0].mxu0 %v1488
      %v2314 = vpop.f32.mrb[0].mxu0
      %v2315 = vadd.f32 0.0, %v2314
      %v2316 = vpop.f32.mrb[0].mxu0
      %2317 = vmatprep.mubr.f32.mxu0 0.0
      %2318 = vmatmul.mubr.f32.gmra.mrb[0].mxu0 %v1491
      %v2319 = vpop.f32.mrb[0].mxu0
      %v2320 = vadd.f32 0.0, %v2319
      %v2321 = vpop.f32.mrb[0].mxu0
      %2322 = vmatprep.mubr.f32.mxu0 0.0
      %2323 = vmatmul.mubr.f32.gmra.mrb[0].mxu0 %v1494
      %v2324 = vpop.f32.mrb[0].mxu0
      %v2325 = vadd.f32 0.0, %v2324
      %v2326 = vpop.f32.mrb[0].mxu0
      %2327 = vmatprep.mubr.f32.mxu0 0.0
      %2328 = vmatmul.mubr.f32.gmra.mrb[0].mxu0 %v1497
      %v2329 = vpop.f32.mrb[0].mxu0
      %v2330 = vadd.f32 0.0, %v2329
      %v2331 = vpop.f32.mrb[0].mxu0
      %2332 = vmatprep.mubr.f32.mxu0 0.0
      %2333 = vmatmul.mubr.f32.gmra.mrb[0].mxu0 %v1500
      %v2334 = vpop.f32.mrb[0].mxu0
      %v2335 = vadd.f32 0.0, %v2334
      %v2336 = vpop.f32.mrb[0].mxu0
      %2337 = vmatprep.mubr.f32.mxu0 0.0
      %2338 = vmatmul.mubr.f32.gmra.mrb[0].mxu0 %v1503
      %v2339 = vpop.f32.mrb[0].mxu0
      %v2340 = vadd.f32 0.0, %v2339
      %v2341 = vpop.f32.mrb[0].mxu0
      %2342 = vmatprep.mubr.f32.mxu0 0.0
      %2343 = vmatmul.mubr.f32.gmra.mrb[0].mxu0 %v1506
      %v2344 = vpop.f32.mrb[0].mxu0
      %v2345 = vadd.f32 0.0, %v2344
      %v2346 = vpop.f32.mrb[0].mxu0
      %2347 = vmatprep.mubr.f32.mxu0 0.0
      %2348 = vmatmul.mubr.f32.gmra.mrb[0].mxu0 %v1509
      %v2349 = vpop.f32.mrb[0].mxu0
      %v2350 = vadd.f32 0.0, %v2349
      %v2351 = vpop.f32.mrb[0].mxu0
      %2352 = vmatprep.mubr.f32.mxu0 0.0
      %2353 = vmatmul.mubr.f32.gmra.mrb[0].mxu0 %v1512
      %v2354 = vpop.f32.mrb[0].mxu0
      %v2355 = vadd.f32 0.0, %v2354
      %v2356 = vpop.f32.mrb[0].mxu0
      %2357 = vdwg.mxu0
      %vm2358 = vcmask 523264
      %v2360 = vsel %vm2358, %v1899, 0
      %v2363 = vsel %vm2358, %v1900, 0
      %v2366 = vsel %vm2358, %v1901, 0
      %v2369 = vsel %vm2358, %v1902, 0
      %v2372 = vsel %vm2358, %v1903, 0
      %v2375 = vsel %vm2358, %v1904, 0
      %v2378 = vsel %vm2358, %v1905, 0
      %v2381 = vsel %vm2358, %v1906, 0
      %v2384 = vsel %vm2358, %v1907, 0
      %v2387 = vsel %vm2358, %v1908, 0
      %v2390 = vsel %vm2358, %v1909, 0
      %v2393 = vsel %vm2358, %v1910, 0
      %v2396 = vsel %vm2358, %v1911, 0
      %v2399 = vsel %vm2358, %v1912, 0
      %v2402 = vsel %vm2358, %v1913, 0
      %v2405 = vsel %vm2358, %v1914, 0
      %v2408 = vsel %vm2358, %v1915, 0
      %v2411 = vsel %vm2358, %v1916, 0
      %v2414 = vsel %vm2358, %v1917, 0
      %v2417 = vsel %vm2358, %v1918, 0
      %v2420 = vsel %vm2358, %v1919, 0
      %v2423 = vsel %vm2358, %v1920, 0
      %v2426 = vsel %vm2358, %v1921, 0
      %v2429 = vsel %vm2358, %v1922, 0
      %v2432 = vsel %vm2358, %v1923, 0
      %v2435 = vsel %vm2358, %v1924, 0
      %v2438 = vsel %vm2358, %v1925, 0
      %v2441 = vsel %vm2358, %v1926, 0
      %v2444 = vsel %vm2358, %v1927, 0
      %v2447 = vsel %vm2358, %v1928, 0
      %v2450 = vsel %vm2358, %v1929, 0
      %v2453 = vsel %vm2358, %v1930, 0
      %v2456 = vsel %vm2358, %v1931, 0
      %v2459 = vsel %vm2358, %v1932, 0
      %v2462 = vsel %vm2358, %v1933, 0
      %v2465 = vsel %vm2358, %v1934, 0
      %v2468 = vsel %vm2358, %v1935, 0
      %v2471 = vsel %vm2358, %v1936, 0
      %v2474 = vsel %vm2358, %v1937, 0
      %v2477 = vsel %vm2358, %v1938, 0
      %v2480 = vsel %vm2358, %v1939, 0
      %v2483 = vsel %vm2358, %v1940, 0
      %v2486 = vsel %vm2358, %v1941, 0
      %v2489 = vsel %vm2358, %v1942, 0
      %v2492 = vsel %vm2358, %v1943, 0
      %v2495 = vsel %vm2358, %v1944, 0
      %v2498 = vsel %vm2358, %v1945, 0
      %v2501 = vsel %vm2358, %v1946, 0
      %v2504 = vsel %vm2358, %v1947, 0
      %v2507 = vsel %vm2358, %v1948, 0
      %v2510 = vsel %vm2358, %v1949, 0
      %v2513 = vsel %vm2358, %v1950, 0
      %v2516 = vsel %vm2358, %v1951, 0
      %v2519 = vsel %vm2358, %v1952, 0
      %v2522 = vsel %vm2358, %v1953, 0
      %v2525 = vsel %vm2358, %v1954, 0
      %v2528 = vsel %vm2358, %v1955, 0
      %v2531 = vsel %vm2358, %v1956, 0
      %v2534 = vsel %vm2358, %v1957, 0
      %v2537 = vsel %vm2358, %v1958, 0
      %v2540 = vsel %vm2358, %v1959, 0
      %v2543 = vsel %vm2358, %v1960, 0
      %v2546 = vsel %vm2358, %v1961, 0
      %v2549 = vsel %vm2358, %v1962, 0
      %2551 = vmatprep.subr.mxu0 0.0
      %2552 = vmatpush1.msra.mxu0 %v1963
      %2553 = vmatprep.subr.mxu0 0.0
      %2554 = vmatpush1.msra.mxu0 %v1964
      %2555 = vmatprep.subr.mxu0 0.0
      %2556 = vmatpush1.msra.mxu0 %v1965
      %2557 = vmatprep.subr.mxu0 0.0
      %2558 = vmatpush1.msra.mxu0 %v1966
      %2559 = vmatprep.subr.mxu0 0.0
      %2560 = vmatpush1.msra.mxu0 %v1967
      %2561 = vmatprep.subr.mxu0 0.0
      %2562 = vmatpush1.msra.mxu0 %v1968
      %2563 = vmatprep.subr.mxu0 0.0
      %2564 = vmatpush1.msra.mxu0 %v1969
      %2565 = vmatprep.subr.mxu0 0.0
      %2566 = vmatpush1.msra.mxu0 %v1970
      %2567 = vmatprep.subr.mxu0 0.0
      %2568 = vmatpush1.msra.mxu0 0.0
      %2569 = vmatprep.subr.mxu0 0.0
      %2570 = vmatpush1.msra.mxu0 0.0
      %2571 = vmatprep.subr.mxu0 0.0
      %2572 = vmatpush1.msra.mxu0 0.0
      %2573 = vmatprep.subr.mxu0 0.0
      %2574 = vmatpush1.msra.mxu0 0.0
      %2575 = vmatprep.subr.mxu0 0.0
      %2576 = vmatpush1.msra.mxu0 0.0
      %2577 = vmatprep.subr.mxu0 0.0
      %2578 = vmatpush1.msra.mxu0 0.0
      %2579 = vmatprep.subr.mxu0 0.0
      %2580 = vmatpush1.msra.mxu0 0.0
      %2581 = vmatprep.subr.mxu0 0.0
      %2582 = vmatpush1.msra.mxu0 0.0
      %2583 = vmatprep.subr.mxu0 0.0
      %2584 = vmatpush1.msra.mxu0 0.0
      %2585 = vmatprep.subr.mxu0 0.0
      %2586 = vmatpush1.msra.mxu0 0.0
      %2587 = vmatprep.subr.mxu0 0.0
      %2588 = vmatpush1.msra.mxu0 0.0
      %2589 = vmatprep.subr.mxu0 0.0
      %2590 = vmatpush1.msra.mxu0 0.0
      %2591 = vmatprep.subr.mxu0 0.0
      %2592 = vmatpush1.msra.mxu0 0.0
      %2593 = vmatprep.subr.mxu0 0.0
      %2594 = vmatpush1.msra.mxu0 0.0
      %2595 = vmatprep.subr.mxu0 0.0
      %2596 = vmatpush1.msra.mxu0 0.0
      %2597 = vmatprep.subr.mxu0 0.0
      %2598 = vmatpush1.msra.mxu0 0.0
      %2599 = vmatprep.subr.mxu0 0.0
      %2600 = vmatpush1.msra.mxu0 0.0
      %2601 = vmatprep.subr.mxu0 0.0
      %2602 = vmatpush1.msra.mxu0 0.0
      %2603 = vmatprep.subr.mxu0 0.0
      %2604 = vmatpush1.msra.mxu0 0.0
      %2605 = vmatprep.subr.mxu0 0.0
      %2606 = vmatpush1.msra.mxu0 0.0
      %2607 = vmatprep.subr.mxu0 0.0
      %2608 = vmatpush1.msra.mxu0 0.0
      %2609 = vmatprep.subr.mxu0 0.0
      %2610 = vmatpush1.msra.mxu0 0.0
      %2611 = vmatprep.subr.mxu0 0.0
      %2612 = vmatpush1.msra.mxu0 0.0
      %2613 = vmatprep.subr.mxu0 0.0
      %2614 = vmatpush1.msra.mxu0 0.0
      %2615 = vmatprep.mubr.f32.mxu0 0.0
      %2616 = vmatmul.mubr.f32.gmra.mrb[0].mxu0 %v2360
      %v2617 = vpop.f32.mrb[0].mxu0
      %v2618 = vadd.f32 %v2040, %v2617
      %v2619 = vpop.f32.mrb[0].mxu0
      %2620 = vmatprep.mubr.f32.mxu0 0.0
      %2621 = vmatmul.mubr.f32.gmra.mrb[0].mxu0 %v2363
      %v2622 = vpop.f32.mrb[0].mxu0
      %v2623 = vadd.f32 %v2045, %v2622
      %v2624 = vpop.f32.mrb[0].mxu0
      %2625 = vmatprep.mubr.f32.mxu0 0.0
      %2626 = vmatmul.mubr.f32.gmra.mrb[0].mxu0 %v2366
      %v2627 = vpop.f32.mrb[0].mxu0
      %v2628 = vadd.f32 %v2050, %v2627
      %v2629 = vpop.f32.mrb[0].mxu0
      %2630 = vmatprep.mubr.f32.mxu0 0.0
      %2631 = vmatmul.mubr.f32.gmra.mrb[0].mxu0 %v2369
      %v2632 = vpop.f32.mrb[0].mxu0
      %v2633 = vadd.f32 %v2055, %v2632
      %v2634 = vpop.f32.mrb[0].mxu0
      %2635 = vmatprep.mubr.f32.mxu0 0.0
      %2636 = vmatmul.mubr.f32.gmra.mrb[0].mxu0 %v2372
      %v2637 = vpop.f32.mrb[0].mxu0
      %v2638 = vadd.f32 %v2060, %v2637
      %v2639 = vpop.f32.mrb[0].mxu0
      %2640 = vmatprep.mubr.f32.mxu0 0.0
      %2641 = vmatmul.mubr.f32.gmra.mrb[0].mxu0 %v2375
      %v2642 = vpop.f32.mrb[0].mxu0
      %v2643 = vadd.f32 %v2065, %v2642
      %v2644 = vpop.f32.mrb[0].mxu0
      %2645 = vmatprep.mubr.f32.mxu0 0.0
      %2646 = vmatmul.mubr.f32.gmra.mrb[0].mxu0 %v2378
      %v2647 = vpop.f32.mrb[0].mxu0
      %v2648 = vadd.f32 %v2070, %v2647
      %v2649 = vpop.f32.mrb[0].mxu0
      %2650 = vmatprep.mubr.f32.mxu0 0.0
      %2651 = vmatmul.mubr.f32.gmra.mrb[0].mxu0 %v2381
      %v2652 = vpop.f32.mrb[0].mxu0
      %v2653 = vadd.f32 %v2075, %v2652
      %v2654 = vpop.f32.mrb[0].mxu0
      %2655 = vmatprep.mubr.f32.mxu0 0.0
      %2656 = vmatmul.mubr.f32.gmra.mrb[0].mxu0 %v2384
      %v2657 = vpop.f32.mrb[0].mxu0
      %v2658 = vadd.f32 %v2080, %v2657
      %v2659 = vpop.f32.mrb[0].mxu0
      %2660 = vmatprep.mubr.f32.mxu0 0.0
      %2661 = vmatmul.mubr.f32.gmra.mrb[0].mxu0 %v2387
      %v2662 = vpop.f32.mrb[0].mxu0
      %v2663 = vadd.f32 %v2085, %v2662
      %v2664 = vpop.f32.mrb[0].mxu0
      %2665 = vmatprep.mubr.f32.mxu0 0.0
      %2666 = vmatmul.mubr.f32.gmra.mrb[0].mxu0 %v2390
      %v2667 = vpop.f32.mrb[0].mxu0
      %v2668 = vadd.f32 %v2090, %v2667
      %v2669 = vpop.f32.mrb[0].mxu0
      %2670 = vmatprep.mubr.f32.mxu0 0.0
      %2671 = vmatmul.mubr.f32.gmra.mrb[0].mxu0 %v2393
      %v2672 = vpop.f32.mrb[0].mxu0
      %v2673 = vadd.f32 %v2095, %v2672
      %v2674 = vpop.f32.mrb[0].mxu0
      %2675 = vmatprep.mubr.f32.mxu0 0.0
      %2676 = vmatmul.mubr.f32.gmra.mrb[0].mxu0 %v2396
      %v2677 = vpop.f32.mrb[0].mxu0
      %v2678 = vadd.f32 %v2100, %v2677
      %v2679 = vpop.f32.mrb[0].mxu0
      %2680 = vmatprep.mubr.f32.mxu0 0.0
      %2681 = vmatmul.mubr.f32.gmra.mrb[0].mxu0 %v2399
      %v2682 = vpop.f32.mrb[0].mxu0
      %v2683 = vadd.f32 %v2105, %v2682
      %v2684 = vpop.f32.mrb[0].mxu0
      %2685 = vmatprep.mubr.f32.mxu0 0.0
      %2686 = vmatmul.mubr.f32.gmra.mrb[0].mxu0 %v2402
      %v2687 = vpop.f32.mrb[0].mxu0
      %v2688 = vadd.f32 %v2110, %v2687
      %v2689 = vpop.f32.mrb[0].mxu0
      %2690 = vmatprep.mubr.f32.mxu0 0.0
      %2691 = vmatmul.mubr.f32.gmra.mrb[0].mxu0 %v2405
      %v2692 = vpop.f32.mrb[0].mxu0
      %v2693 = vadd.f32 %v2115, %v2692
      %v2694 = vpop.f32.mrb[0].mxu0
      %2695 = vmatprep.mubr.f32.mxu0 0.0
      %2696 = vmatmul.mubr.f32.gmra.mrb[0].mxu0 %v2408
      %v2697 = vpop.f32.mrb[0].mxu0
      %v2698 = vadd.f32 %v2120, %v2697
      %v2699 = vpop.f32.mrb[0].mxu0
      %2700 = vmatprep.mubr.f32.mxu0 0.0
      %2701 = vmatmul.mubr.f32.gmra.mrb[0].mxu0 %v2411
      %v2702 = vpop.f32.mrb[0].mxu0
      %v2703 = vadd.f32 %v2125, %v2702
      %v2704 = vpop.f32.mrb[0].mxu0
      %2705 = vmatprep.mubr.f32.mxu0 0.0
      %2706 = vmatmul.mubr.f32.gmra.mrb[0].mxu0 %v2414
      %v2707 = vpop.f32.mrb[0].mxu0
      %v2708 = vadd.f32 %v2130, %v2707
      %v2709 = vpop.f32.mrb[0].mxu0
      %2710 = vmatprep.mubr.f32.mxu0 0.0
      %2711 = vmatmul.mubr.f32.gmra.mrb[0].mxu0 %v2417
      %v2712 = vpop.f32.mrb[0].mxu0
      %v2713 = vadd.f32 %v2135, %v2712
      %v2714 = vpop.f32.mrb[0].mxu0
      %2715 = vmatprep.mubr.f32.mxu0 0.0
      %2716 = vmatmul.mubr.f32.gmra.mrb[0].mxu0 %v2420
      %v2717 = vpop.f32.mrb[0].mxu0
      %v2718 = vadd.f32 %v2140, %v2717
      %v2719 = vpop.f32.mrb[0].mxu0
      %2720 = vmatprep.mubr.f32.mxu0 0.0
      %2721 = vmatmul.mubr.f32.gmra.mrb[0].mxu0 %v2423
      %v2722 = vpop.f32.mrb[0].mxu0
      %v2723 = vadd.f32 %v2145, %v2722
      %v2724 = vpop.f32.mrb[0].mxu0
      %2725 = vmatprep.mubr.f32.mxu0 0.0
      %2726 = vmatmul.mubr.f32.gmra.mrb[0].mxu0 %v2426
      %v2727 = vpop.f32.mrb[0].mxu0
      %v2728 = vadd.f32 %v2150, %v2727
      %v2729 = vpop.f32.mrb[0].mxu0
      %2730 = vmatprep.mubr.f32.mxu0 0.0
      %2731 = vmatmul.mubr.f32.gmra.mrb[0].mxu0 %v2429
      %v2732 = vpop.f32.mrb[0].mxu0
      %v2733 = vadd.f32 %v2155, %v2732
      %v2734 = vpop.f32.mrb[0].mxu0
      %2735 = vmatprep.mubr.f32.mxu0 0.0
      %2736 = vmatmul.mubr.f32.gmra.mrb[0].mxu0 %v2432
      %v2737 = vpop.f32.mrb[0].mxu0
      %v2738 = vadd.f32 %v2160, %v2737
      %v2739 = vpop.f32.mrb[0].mxu0
      %2740 = vmatprep.mubr.f32.mxu0 0.0
      %2741 = vmatmul.mubr.f32.gmra.mrb[0].mxu0 %v2435
      %v2742 = vpop.f32.mrb[0].mxu0
      %v2743 = vadd.f32 %v2165, %v2742
      %v2744 = vpop.f32.mrb[0].mxu0
      %2745 = vmatprep.mubr.f32.mxu0 0.0
      %2746 = vmatmul.mubr.f32.gmra.mrb[0].mxu0 %v2438
      %v2747 = vpop.f32.mrb[0].mxu0
      %v2748 = vadd.f32 %v2170, %v2747
      %v2749 = vpop.f32.mrb[0].mxu0
      %2750 = vmatprep.mubr.f32.mxu0 0.0
      %2751 = vmatmul.mubr.f32.gmra.mrb[0].mxu0 %v2441
      %v2752 = vpop.f32.mrb[0].mxu0
      %v2753 = vadd.f32 %v2175, %v2752
      %v2754 = vpop.f32.mrb[0].mxu0
      %2755 = vmatprep.mubr.f32.mxu0 0.0
      %2756 = vmatmul.mubr.f32.gmra.mrb[0].mxu0 %v2444
      %v2757 = vpop.f32.mrb[0].mxu0
      %v2758 = vadd.f32 %v2180, %v2757
      %v2759 = vpop.f32.mrb[0].mxu0
      %2760 = vmatprep.mubr.f32.mxu0 0.0
      %2761 = vmatmul.mubr.f32.gmra.mrb[0].mxu0 %v2447
      %v2762 = vpop.f32.mrb[0].mxu0
      %v2763 = vadd.f32 %v2185, %v2762
      %v2764 = vpop.f32.mrb[0].mxu0
      %2765 = vmatprep.mubr.f32.mxu0 0.0
      %2766 = vmatmul.mubr.f32.gmra.mrb[0].mxu0 %v2450
      %v2767 = vpop.f32.mrb[0].mxu0
      %v2768 = vadd.f32 %v2190, %v2767
      %v2769 = vpop.f32.mrb[0].mxu0
      %2770 = vmatprep.mubr.f32.mxu0 0.0
      %2771 = vmatmul.mubr.f32.gmra.mrb[0].mxu0 %v2453
      %v2772 = vpop.f32.mrb[0].mxu0
      %v2773 = vadd.f32 %v2195, %v2772
      %v2774 = vpop.f32.mrb[0].mxu0
      %2775 = vmatprep.mubr.f32.mxu0 0.0
      %2776 = vmatmul.mubr.f32.gmra.mrb[0].mxu0 %v2456
      %v2777 = vpop.f32.mrb[0].mxu0
      %v2778 = vadd.f32 %v2200, %v2777
      %v2779 = vpop.f32.mrb[0].mxu0
      %2780 = vmatprep.mubr.f32.mxu0 0.0
      %2781 = vmatmul.mubr.f32.gmra.mrb[0].mxu0 %v2459
      %v2782 = vpop.f32.mrb[0].mxu0
      %v2783 = vadd.f32 %v2205, %v2782
      %v2784 = vpop.f32.mrb[0].mxu0
      %2785 = vmatprep.mubr.f32.mxu0 0.0
      %2786 = vmatmul.mubr.f32.gmra.mrb[0].mxu0 %v2462
      %v2787 = vpop.f32.mrb[0].mxu0
      %v2788 = vadd.f32 %v2210, %v2787
      %v2789 = vpop.f32.mrb[0].mxu0
      %2790 = vmatprep.mubr.f32.mxu0 0.0
      %2791 = vmatmul.mubr.f32.gmra.mrb[0].mxu0 %v2465
      %v2792 = vpop.f32.mrb[0].mxu0
      %v2793 = vadd.f32 %v2215, %v2792
      %v2794 = vpop.f32.mrb[0].mxu0
      %2795 = vmatprep.mubr.f32.mxu0 0.0
      %2796 = vmatmul.mubr.f32.gmra.mrb[0].mxu0 %v2468
      %v2797 = vpop.f32.mrb[0].mxu0
      %v2798 = vadd.f32 %v2220, %v2797
      %v2799 = vpop.f32.mrb[0].mxu0
      %2800 = vmatprep.mubr.f32.mxu0 0.0
      %2801 = vmatmul.mubr.f32.gmra.mrb[0].mxu0 %v2471
      %v2802 = vpop.f32.mrb[0].mxu0
      %v2803 = vadd.f32 %v2225, %v2802
      %v2804 = vpop.f32.mrb[0].mxu0
      %2805 = vmatprep.mubr.f32.mxu0 0.0
      %2806 = vmatmul.mubr.f32.gmra.mrb[0].mxu0 %v2474
      %v2807 = vpop.f32.mrb[0].mxu0
      %v2808 = vadd.f32 %v2230, %v2807
      %v2809 = vpop.f32.mrb[0].mxu0
      %2810 = vmatprep.mubr.f32.mxu0 0.0
      %2811 = vmatmul.mubr.f32.gmra.mrb[0].mxu0 %v2477
      %v2812 = vpop.f32.mrb[0].mxu0
      %v2813 = vadd.f32 %v2235, %v2812
      %v2814 = vpop.f32.mrb[0].mxu0
      %2815 = vmatprep.mubr.f32.mxu0 0.0
      %2816 = vmatmul.mubr.f32.gmra.mrb[0].mxu0 %v2480
      %v2817 = vpop.f32.mrb[0].mxu0
      %v2818 = vadd.f32 %v2240, %v2817
      %v2819 = vpop.f32.mrb[0].mxu0
      %2820 = vmatprep.mubr.f32.mxu0 0.0
      %2821 = vmatmul.mubr.f32.gmra.mrb[0].mxu0 %v2483
      %v2822 = vpop.f32.mrb[0].mxu0
      %v2823 = vadd.f32 %v2245, %v2822
      %v2824 = vpop.f32.mrb[0].mxu0
      %2825 = vmatprep.mubr.f32.mxu0 0.0
      %2826 = vmatmul.mubr.f32.gmra.mrb[0].mxu0 %v2486
      %v2827 = vpop.f32.mrb[0].mxu0
      %v2828 = vadd.f32 %v2250, %v2827
      %v2829 = vpop.f32.mrb[0].mxu0
      %2830 = vmatprep.mubr.f32.mxu0 0.0
      %2831 = vmatmul.mubr.f32.gmra.mrb[0].mxu0 %v2489
      %v2832 = vpop.f32.mrb[0].mxu0
      %v2833 = vadd.f32 %v2255, %v2832
      %v2834 = vpop.f32.mrb[0].mxu0
      %2835 = vmatprep.mubr.f32.mxu0 0.0
      %2836 = vmatmul.mubr.f32.gmra.mrb[0].mxu0 %v2492
      %v2837 = vpop.f32.mrb[0].mxu0
      %v2838 = vadd.f32 %v2260, %v2837
      %v2839 = vpop.f32.mrb[0].mxu0
      %2840 = vmatprep.mubr.f32.mxu0 0.0
      %2841 = vmatmul.mubr.f32.gmra.mrb[0].mxu0 %v2495
      %v2842 = vpop.f32.mrb[0].mxu0
      %v2843 = vadd.f32 %v2265, %v2842
      %v2844 = vpop.f32.mrb[0].mxu0
      %2845 = vmatprep.mubr.f32.mxu0 0.0
      %2846 = vmatmul.mubr.f32.gmra.mrb[0].mxu0 %v2498
      %v2847 = vpop.f32.mrb[0].mxu0
      %v2848 = vadd.f32 %v2270, %v2847
      %v2849 = vpop.f32.mrb[0].mxu0
      %2850 = vmatprep.mubr.f32.mxu0 0.0
      %2851 = vmatmul.mubr.f32.gmra.mrb[0].mxu0 %v2501
      %v2852 = vpop.f32.mrb[0].mxu0
      %v2853 = vadd.f32 %v2275, %v2852
      %v2854 = vpop.f32.mrb[0].mxu0
      %2855 = vmatprep.mubr.f32.mxu0 0.0
      %2856 = vmatmul.mubr.f32.gmra.mrb[0].mxu0 %v2504
      %v2857 = vpop.f32.mrb[0].mxu0
      %v2858 = vadd.f32 %v2280, %v2857
      %v2859 = vpop.f32.mrb[0].mxu0
      %2860 = vmatprep.mubr.f32.mxu0 0.0
      %2861 = vmatmul.mubr.f32.gmra.mrb[0].mxu0 %v2507
      %v2862 = vpop.f32.mrb[0].mxu0
      %v2863 = vadd.f32 %v2285, %v2862
      %v2864 = vpop.f32.mrb[0].mxu0
      %2865 = vmatprep.mubr.f32.mxu0 0.0
      %2866 = vmatmul.mubr.f32.gmra.mrb[0].mxu0 %v2510
      %v2867 = vpop.f32.mrb[0].mxu0
      %v2868 = vadd.f32 %v2290, %v2867
      %v2869 = vpop.f32.mrb[0].mxu0
      %2870 = vmatprep.mubr.f32.mxu0 0.0
      %2871 = vmatmul.mubr.f32.gmra.mrb[0].mxu0 %v2513
      %v2872 = vpop.f32.mrb[0].mxu0
      %v2873 = vadd.f32 %v2295, %v2872
      %v2874 = vpop.f32.mrb[0].mxu0
      %2875 = vmatprep.mubr.f32.mxu0 0.0
      %2876 = vmatmul.mubr.f32.gmra.mrb[0].mxu0 %v2516
      %v2877 = vpop.f32.mrb[0].mxu0
      %v2878 = vadd.f32 %v2300, %v2877
      %v2879 = vpop.f32.mrb[0].mxu0
      %2880 = vmatprep.mubr.f32.mxu0 0.0
      %2881 = vmatmul.mubr.f32.gmra.mrb[0].mxu0 %v2519
      %v2882 = vpop.f32.mrb[0].mxu0
      %v2883 = vadd.f32 %v2305, %v2882
      %v2884 = vpop.f32.mrb[0].mxu0
      %2885 = vmatprep.mubr.f32.mxu0 0.0
      %2886 = vmatmul.mubr.f32.gmra.mrb[0].mxu0 %v2522
      %v2887 = vpop.f32.mrb[0].mxu0
      %v2888 = vadd.f32 %v2310, %v2887
      %v2889 = vpop.f32.mrb[0].mxu0
      %2890 = vmatprep.mubr.f32.mxu0 0.0
      %2891 = vmatmul.mubr.f32.gmra.mrb[0].mxu0 %v2525
      %v2892 = vpop.f32.mrb[0].mxu0
      %v2893 = vadd.f32 %v2315, %v2892
      %v2894 = vpop.f32.mrb[0].mxu0
      %2895 = vmatprep.mubr.f32.mxu0 0.0
      %2896 = vmatmul.mubr.f32.gmra.mrb[0].mxu0 %v2528
      %v2897 = vpop.f32.mrb[0].mxu0
      %v2898 = vadd.f32 %v2320, %v2897
      %v2899 = vpop.f32.mrb[0].mxu0
      %2900 = vmatprep.mubr.f32.mxu0 0.0
      %2901 = vmatmul.mubr.f32.gmra.mrb[0].mxu0 %v2531
      %v2902 = vpop.f32.mrb[0].mxu0
      %v2903 = vadd.f32 %v2325, %v2902
      %v2904 = vpop.f32.mrb[0].mxu0
      %2905 = vmatprep.mubr.f32.mxu0 0.0
      %2906 = vmatmul.mubr.f32.gmra.mrb[0].mxu0 %v2534
      %v2907 = vpop.f32.mrb[0].mxu0
      %v2908 = vadd.f32 %v2330, %v2907
      %v2909 = vpop.f32.mrb[0].mxu0
      %2910 = vmatprep.mubr.f32.mxu0 0.0
      %2911 = vmatmul.mubr.f32.gmra.mrb[0].mxu0 %v2537
      %v2912 = vpop.f32.mrb[0].mxu0
      %v2913 = vadd.f32 %v2335, %v2912
      %v2914 = vpop.f32.mrb[0].mxu0
      %2915 = vmatprep.mubr.f32.mxu0 0.0
      %2916 = vmatmul.mubr.f32.gmra.mrb[0].mxu0 %v2540
      %v2917 = vpop.f32.mrb[0].mxu0
      %v2918 = vadd.f32 %v2340, %v2917
      %v2919 = vpop.f32.mrb[0].mxu0
      %2920 = vmatprep.mubr.f32.mxu0 0.0
      %2921 = vmatmul.mubr.f32.gmra.mrb[0].mxu0 %v2543
      %v2922 = vpop.f32.mrb[0].mxu0
      %v2923 = vadd.f32 %v2345, %v2922
      %v2924 = vpop.f32.mrb[0].mxu0
      %2925 = vmatprep.mubr.f32.mxu0 0.0
      %2926 = vmatmul.mubr.f32.gmra.mrb[0].mxu0 %v2546
      %v2927 = vpop.f32.mrb[0].mxu0
      %v2928 = vadd.f32 %v2350, %v2927
      %v2929 = vpop.f32.mrb[0].mxu0
      %2930 = vmatprep.mubr.f32.mxu0 0.0
      %2931 = vmatmul.mubr.f32.gmra.mrb[0].mxu0 %v2549
      %v2932 = vpop.f32.mrb[0].mxu0
      %v2933 = vadd.f32 %v2355, %v2932
      %v2934 = vpop.f32.mrb[0].mxu0
      %2935 = vdwg.mxu0
      %2936 = vst [vmem:[%s226] sm:$0xff] %v2618
      %2937 = vst [vmem:[%s226 + $0x8] sm:$0xff] %v2623
      %2938 = vst [vmem:[%s226 + $0x10] sm:$0xff] %v2628
      %2939 = vst [vmem:[%s226 + $0x18] sm:$0xff] %v2633
      %2940 = vst [vmem:[%s226 + $0x20] sm:$0xff] %v2638
      %2941 = vst [vmem:[%s226 + $0x28] sm:$0xff] %v2643
      %2942 = vst [vmem:[%s226 + $0x30] sm:$0xff] %v2648
      %2943 = vst [vmem:[%s226 + $0x38] sm:$0xff] %v2653
      %2944 = vst [vmem:[%s226 + $0x40] sm:$0xff] %v2658
      %2945 = vst [vmem:[%s226 + $0x48] sm:$0xff] %v2663
      %2946 = vst [vmem:[%s226 + $0x50] sm:$0xff] %v2668
      %2947 = vst [vmem:[%s226 + $0x58] sm:$0xff] %v2673
      %2948 = vst [vmem:[%s226 + $0x60] sm:$0xff] %v2678
      %2949 = vst [vmem:[%s226 + $0x68] sm:$0xff] %v2683
      %2950 = vst [vmem:[%s226 + $0x70] sm:$0xff] %v2688
      %2951 = vst [vmem:[%s226 + $0x78] sm:$0xff] %v2693
      %2952 = vst [vmem:[%s226 + $0x80] sm:$0xff] %v2698
      %2953 = vst [vmem:[%s226 + $0x88] sm:$0xff] %v2703
      %2954 = vst [vmem:[%s226 + $0x90] sm:$0xff] %v2708
      %2955 = vst [vmem:[%s226 + $0x98] sm:$0xff] %v2713
      %2956 = vst [vmem:[%s226 + $0xa0] sm:$0xff] %v2718
      %2957 = vst [vmem:[%s226 + $0xa8] sm:$0xff] %v2723
      %2958 = vst [vmem:[%s226 + $0xb0] sm:$0xff] %v2728
      %2959 = vst [vmem:[%s226 + $0xb8] sm:$0xff] %v2733
      %2960 = vst [vmem:[%s226 + $0xc0] sm:$0xff] %v2738
      %2961 = vst [vmem:[%s226 + $0xc8] sm:$0xff] %v2743
      %2962 = vst [vmem:[%s226 + $0xd0] sm:$0xff] %v2748
      %2963 = vst [vmem:[%s226 + $0xd8] sm:$0xff] %v2753
      %2964 = vst [vmem:[%s226 + $0xe0] sm:$0xff] %v2758
      %2965 = vst [vmem:[%s226 + $0xe8] sm:$0xff] %v2763
      %2966 = vst [vmem:[%s226 + $0xf0] sm:$0xff] %v2768
      %2967 = vst [vmem:[%s226 + $0xf8] sm:$0xff] %v2773
      %2968 = vst [vmem:[%s226 + $0x100] sm:$0xff] %v2778
      %2969 = vst [vmem:[%s226 + $0x108] sm:$0xff] %v2783
      %2970 = vst [vmem:[%s226 + $0x110] sm:$0xff] %v2788
      %2971 = vst [vmem:[%s226 + $0x118] sm:$0xff] %v2793
      %2972 = vst [vmem:[%s226 + $0x120] sm:$0xff] %v2798
      %2973 = vst [vmem:[%s226 + $0x128] sm:$0xff] %v2803
      %2974 = vst [vmem:[%s226 + $0x130] sm:$0xff] %v2808
      %2975 = vst [vmem:[%s226 + $0x138] sm:$0xff] %v2813
      %2976 = vst [vmem:[%s226 + $0x140] sm:$0xff] %v2818
      %2977 = vst [vmem:[%s226 + $0x148] sm:$0xff] %v2823
      %2978 = vst [vmem:[%s226 + $0x150] sm:$0xff] %v2828
      %2979 = vst [vmem:[%s226 + $0x158] sm:$0xff] %v2833
      %2980 = vst [vmem:[%s226 + $0x160] sm:$0xff] %v2838
      %2981 = vst [vmem:[%s226 + $0x168] sm:$0xff] %v2843
      %2982 = vst [vmem:[%s226 + $0x170] sm:$0xff] %v2848
      %2983 = vst [vmem:[%s226 + $0x178] sm:$0xff] %v2853
      %2984 = vst [vmem:[%s226 + $0x180] sm:$0xff] %v2858
      %2985 = vst [vmem:[%s226 + $0x188] sm:$0xff] %v2863
      %2986 = vst [vmem:[%s226 + $0x190] sm:$0xff] %v2868
      %2987 = vst [vmem:[%s226 + $0x198] sm:$0xff] %v2873
      %2988 = vst [vmem:[%s226 + $0x1a0] sm:$0xff] %v2878
      %2989 = vst [vmem:[%s226 + $0x1a8] sm:$0xff] %v2883
      %2990 = vst [vmem:[%s226 + $0x1b0] sm:$0xff] %v2888
      %2991 = vst [vmem:[%s226 + $0x1b8] sm:$0xff] %v2893
      %2992 = vst [vmem:[%s226 + $0x1c0] sm:$0xff] %v2898
      %2993 = vst [vmem:[%s226 + $0x1c8] sm:$0xff] %v2903
      %2994 = vst [vmem:[%s226 + $0x1d0] sm:$0xff] %v2908
      %2995 = vst [vmem:[%s226 + $0x1d8] sm:$0xff] %v2913
      %2996 = vst [vmem:[%s226 + $0x1e0] sm:$0xff] %v2918
      %2997 = vst [vmem:[%s226 + $0x1e8] sm:$0xff] %v2923
      %2998 = vst [vmem:[%s226 + $0x1f0] sm:$0xff] %v2928
      %2999 = vst [vmem:[%s226 + $0x1f8] sm:$0xff] %v2933
      %s3000 = smul.u32 64, %s16
      %p3001 = scmp.lt.s32.totalorder %s3000, 127
      %s3002 = scalar_select %p3001, %s3000, 127
      %s3003 = smul.addr %s3002, 8
      %s3004 = scalar_lea.vmem %s5, %s3003
      // Predicated region
      $region41: #{nan_embed.1} parent=39 // pred_check
        %p3005 = pneg %p144
      $region42: #{nan_embed.1} parent=39 // pred_check_branch
        %3007 = sbr.rel (%p3005) target = $region44
      $region43: #{nan_embed.1} parent=39 // pred_region
        %s3008 = smul.u32 64, %s16
      $region44: #{nan_embed.1} parent=39 // pred_fallthru
        _
    $region40: #{nan_embed.1} parent=5 // pred_fallthru
      _
    %p3009 = scmp.le.s32.totalorder 2, %s11
    // Predicated region
    $region45: #{nan_embed.1} parent=5 // pred_check
      %p3010 = pneg %p3009
    $region46: #{nan_embed.1} parent=5 // pred_check_branch
      %3012 = sbr.rel (%p3010) target = $region48
    $region47: #{nan_embed.1} parent=5 // pred_region
      %s3013 = ssub.s32 %s11, 2
      // Predicated region
      $region49: #{nan_embed.1} parent=47 // pred_check
        %p3014 = pneg %p150
      $region50: #{nan_embed.1} parent=47 // pred_check_branch
        %3016 = sbr.rel (%p3014) target = $region52
      $region51: #{nan_embed.1} parent=47 // pred_region
        %s3017 = smul.u32 64, %s17
        %p3018 = scmp.lt.s32.totalorder %s3017, 127
        %s3019 = scalar_select %p3018, %s3017, 127
        %s3020 = smul.addr %s3019, 8
        %s3021 = scalar_lea.vmem %s5, %s3020
      $region52: #{nan_embed.1} parent=47 // pred_fallthru
        _
    $region48: #{nan_embed.1} parent=5 // pred_fallthru
      _
  $region6: #{nan_embed.1} parent=0 // loop_footer
    %s15 = sadd.s32 1, %s11
  $region7: #{nan_embed.1} parent=0 // loop_footer_branch
    %10 = sbr.rel target = $region3
  $region8: #{nan_embed.1} parent=0 // loop_exit
    _

</llo_original>
